<compile_context>
chip_gen: v7x
topology: tpu7x:2x2x1
jax: 0.10.0
libtpu: 0.0.40
codegen_flags: <defaults>
</compile_context>

<pallas_src>
import functools

import jax
import jax.numpy as jnp
from jax.experimental import pallas as pl
from jax.experimental.pallas import tpu as pltpu

NEG_SLOPE = 0.01  # torch.nn.LeakyReLU default


def _leaky_relu(x):
    return jnp.where(x > 0, x, NEG_SLOPE * x)


# -----------------------------------------------------------------------------
# Parameter packing: OIHW 3x3 conv weights -> banded (3, W*Cin, W*Cout) matrices
# -----------------------------------------------------------------------------
def _banded_conv_matrix(w_oihw, W):
    """A[kh, s*Cin+ci, d*Cout+co] = weight[co, ci, kh, kw] where s = d + kw - 1.

    Multiplying a row-flattened image row (lane index = w*Cin + ci) by A[kh]
    yields, for every output column d and channel co, the kh-th kernel-row
    contribution.  Out-of-range taps (d+kw-1 outside [0, W)) have no band
    entry, which implements the left/right zero padding exactly."""
    Cout, Cin, KH, KW = w_oihw.shape
    assert KH == 3 and KW == 3
    w = jnp.transpose(w_oihw, (2, 3, 1, 0)).astype(jnp.float32)   # (kh, kw, ci, co)
    src = jnp.arange(W)[None, :, None]                            # s
    dst = jnp.arange(W)[None, None, :]                            # d
    kw = jnp.arange(3)[:, None, None]                             # kw
    sel = (src == dst + kw - 1).astype(jnp.float32)               # (3, W, W)
    a5 = jnp.einsum("ksd,hkio->hsido", sel, w)                    # (3, W, Cin, W, Cout)
    # bf16 operands: 2-4x MXU rate on all generations, half the resident VMEM.
    return a5.reshape(3, W * Cin, W * Cout).astype(jnp.bfloat16)


def pack_params(w1_oihw, b1, w2_oihw, b2, W):
    """Convert torch-layout (OIHW weights, per-channel bias) params to kernel form."""
    return {
        "a1": _banded_conv_matrix(w1_oihw, W),
        "b1": jnp.tile(b1.reshape(-1).astype(jnp.float32), W).reshape(1, -1),
        "a2": _banded_conv_matrix(w2_oihw, W),
        "b2": jnp.tile(b2.reshape(-1).astype(jnp.float32), W).reshape(1, -1),
    }


# -----------------------------------------------------------------------------
# Fused BasicBlock kernel (BN images per grid step, flattened to BN*H rows)
# -----------------------------------------------------------------------------
def _basic_block_kernel(x_ref, a1_ref, b1_ref, a2_ref, b2_ref, out_ref, *, H):
    """x_ref/out_ref: (BN*H, W*C) lane-dense rows.  a*_ref: (3, W*C, W*C) bf16
    banded weights.  b*_ref: (1, W*C) f32 tiled bias."""
    M = x_ref.shape[0]                                   # BN * H

    # Per-image vertical-halo masks over the flattened row axis.  They also
    # zero the roll wrap-around rows (which always land on an image boundary).
    h = jax.lax.broadcasted_iota(jnp.int32, (M, 1), 0) % H
    has_above = h != 0
    has_below = h != (H - 1)

    def conv3x3(rows, a_ref, b_ref):
        # kh=0 tap sees the row above (XLU sublane roll down by 1, masked),
        # kh=2 tap sees the row below (roll up by 1, masked).
        above = jnp.where(has_above, pltpu.roll(rows, shift=1, axis=0), 0.0)
        below = jnp.where(has_below, pltpu.roll(rows, shift=M - 1, axis=0), 0.0)
        acc = jnp.dot(above.astype(jnp.bfloat16), a_ref[0],
                      preferred_element_type=jnp.float32)
        acc += jnp.dot(rows.astype(jnp.bfloat16), a_ref[1],
                       preferred_element_type=jnp.float32)
        acc += jnp.dot(below.astype(jnp.bfloat16), a_ref[2],
                       preferred_element_type=jnp.float32)
        # TODO(synk): on v6e/v7x, measure fusing the 3 dots into one K=3*W*C dot.
        return acc + b_ref[...]

    x = x_ref[...]                                            # f32 (M, W*C)
    mid = _leaky_relu(conv3x3(x, a1_ref, b1_ref))             # conv1 + bias + LReLU
    out = conv3x3(mid, a2_ref, b2_ref) + x                    # conv2 + bias + identity
    out_ref[...] = _leaky_relu(out).astype(out_ref.dtype)     # single lane-dense store


def basic_block_pallas(x_nhwc, packed, *, block_n=8):
    """x_nhwc: (N, H, W, C) float32.  block_n: images per grid step
    (8 -> M=128, enough for v5e; use 16 on v6e/v7x for M=256)."""
    N, H, W, C = x_nhwc.shape
    WC = W * C
    a1, b1, a2, b2 = packed["a1"], packed["b1"], packed["a2"], packed["b2"]
    assert a1.shape == (3, WC, WC) and a2.shape == (3, WC, WC)
    assert b1.shape == (1, WC) and b2.shape == (1, WC)

    BN = min(block_n, N)
    n_blocks = pl.cdiv(N, BN)
    M = BN * H

    # Flatten to lane-dense rows (pure reshape, no transpose / relayout).
    x2d = x_nhwc.astype(jnp.float32).reshape(N * H, WC)
    rows_pad = n_blocks * BN * H
    if rows_pad != N * H:                                  # ragged batch -> zero-pad
        x2d = jnp.pad(x2d, ((0, rows_pad - N * H), (0, 0)))

    kernel = functools.partial(_basic_block_kernel, H=H)
    out2d = pl.pallas_call(
        kernel,
        out_shape=jax.ShapeDtypeStruct((rows_pad, WC), jnp.float32),
        grid=(n_blocks,),
        in_specs=[
            pl.BlockSpec((M, WC), lambda n: (n, 0)),        # activation row band
            pl.BlockSpec((3, WC, WC), lambda n: (0, 0, 0)),  # banded W1 (resident)
            pl.BlockSpec((1, WC), lambda n: (0, 0)),         # bias1
            pl.BlockSpec((3, WC, WC), lambda n: (0, 0, 0)),  # banded W2 (resident)
            pl.BlockSpec((1, WC), lambda n: (0, 0)),         # bias2
        ],
        out_specs=pl.BlockSpec((M, WC), lambda n: (n, 0)),
        compiler_params=pltpu.CompilerParams(
            dimension_semantics=("parallel",)),
    )(x2d, a1, b1, a2, b2)

    if rows_pad != N * H:
        out2d = out2d[:N * H]
    return out2d.reshape(N, H, W, C)


# -----------------------------------------------------------------------------
# Pure-JAX reference (validation only, NHWC so no activation transposes anywhere)
# -----------------------------------------------------------------------------
def basic_block_reference(x_nhwc, w1_oihw, b1, w2_oihw, b2):
    dn = ("NHWC", "HWIO", "NHWC")
    p = jax.lax.Precision.HIGHEST
    w1 = jnp.transpose(w1_oihw, (2, 3, 1, 0)).astype(jnp.float32)
    w2 = jnp.transpose(w2_oihw, (2, 3, 1, 0)).astype(jnp.float32)
    out = jax.lax.conv_general_dilated(x_nhwc, w1, (1, 1), "SAME",
                                       dimension_numbers=dn, precision=p)
    out = _leaky_relu(out + b1.reshape(1, 1, 1, -1))
    out = jax.lax.conv_general_dilated(out, w2, (1, 1), "SAME",
                                       dimension_numbers=dn, precision=p)
    out = out + b2.reshape(1, 1, 1, -1)
    return _leaky_relu(out + x_nhwc)


if __name__ == "__main__":
    key = jax.random.PRNGKey(0)
    kx, kw1, kb1, kw2, kb2 = jax.random.split(key, 5)

    # inplanes == planes (required by the residual add when downsample is None).
    # W*C = 16*8 = 128 keeps every load / MXU operand / store lane-dense;
    # B=16 with BN=8 gives two grid steps, each a full 128-row MXU LHS.
    B, C, H, W = 16, 8, 16, 16
    bound = 1.0 / (C * 9) ** 0.5   # PyTorch Conv2d default init range

    x = jax.random.normal(kx, (B, H, W, C), jnp.float32)                     # NHWC
    w1 = jax.random.uniform(kw1, (C, C, 3, 3), jnp.float32, -bound, bound)   # OIHW
    b1 = jax.random.uniform(kb1, (C,), jnp.float32, -bound, bound)
    w2 = jax.random.uniform(kw2, (C, C, 3, 3), jnp.float32, -bound, bound)
    b2 = jax.random.uniform(kb2, (C,), jnp.float32, -bound, bound)

    packed = pack_params(w1, b1, w2, b2, W)

    fwd = jax.jit(basic_block_pallas)
    out = jax.block_until_ready(fwd(x, packed))

    ref = basic_block_reference(x, w1, b1, w2, b2)
    assert out.shape == (B, H, W, C)
    max_err = float(jnp.max(jnp.abs(out - ref)))
    # bf16 MXU operands (8-bit mantissa) over K=128, two chained convs.
    assert max_err < 5e-2, f"mismatch vs reference: max abs err = {max_err}"

    print("KERNEL_OK")
</pallas_src>

<mosaic_0001>
module attributes {stable_mosaic.version = 11 : i64} {
  func.func @_basic_block_kernel(%arg0: i32, %arg1: memref<128x128xf32, #tpu.memory_space<vmem>>, %arg2: memref<3x128x128xbf16, #tpu.memory_space<vmem>>, %arg3: memref<1x128xf32, #tpu.memory_space<vmem>>, %arg4: memref<3x128x128xbf16, #tpu.memory_space<vmem>>, %arg5: memref<1x128xf32, #tpu.memory_space<vmem>>, %arg6: memref<128x128xf32, #tpu.memory_space<vmem>>) attributes {dimension_semantics = [#tpu.dimension_semantics<parallel>], iteration_bounds = array<i64: 2>, scalar_prefetch = 0 : i64, scratch_operands = 0 : i64, tpu.core_type = #tpu.core_type<tc>, window_params = [{transform_indices = @transform_0, window_bounds = array<i64: 128, 128>}, {pipeline_mode = #tpu.pipeline_mode<synchronous>, transform_indices = @transform_1, window_bounds = array<i64: 3, 128, 128>}, {pipeline_mode = #tpu.pipeline_mode<synchronous>, transform_indices = @transform_2, window_bounds = array<i64: 1, 128>}, {pipeline_mode = #tpu.pipeline_mode<synchronous>, transform_indices = @transform_3, window_bounds = array<i64: 3, 128, 128>}, {pipeline_mode = #tpu.pipeline_mode<synchronous>, transform_indices = @transform_4, window_bounds = array<i64: 1, 128>}, {transform_indices = @transform_5, window_bounds = array<i64: 128, 128>}]} {
    %0 = tpu.iota {dimensions = array<i32: 0>} : vector<128x1xi32>
    %c16_i32 = arith.constant 16 : i32
    %c0_i32 = arith.constant 0 : i32
    %1 = arith.cmpi eq, %c16_i32, %c0_i32 : i32
    %c1_i32 = arith.constant 1 : i32
    %2 = arith.select %1, %c1_i32, %c16_i32 : i32
    %3 = vector.broadcast %2 : i32 to vector<128x1xi32>
    %4 = arith.remsi %0, %3 : vector<128x1xi32>
    %c0_i32_0 = arith.constant 0 : i32
    %5 = vector.broadcast %c0_i32_0 : i32 to vector<128x1xi32>
    %6 = arith.cmpi ne, %4, %5 : vector<128x1xi32>
    %c0_i32_1 = arith.constant 0 : i32
    %7 = vector.broadcast %c0_i32_1 : i32 to vector<128x1xi32>
    %8 = arith.cmpi slt, %4, %7 : vector<128x1xi32>
    %c0_i32_2 = arith.constant 0 : i32
    %9 = arith.cmpi slt, %2, %c0_i32_2 : i32
    %10 = vector.broadcast %9 : i1 to vector<128x1xi1>
    %11 = vector.broadcast %10 : vector<128x1xi1> to vector<128x1xi1>
    %12 = arith.xori %8, %11 : vector<128x1xi1>
    %13 = arith.andi %12, %6 : vector<128x1xi1>
    %14 = vector.broadcast %2 : i32 to vector<128x1xi32>
    %15 = arith.addi %4, %14 : vector<128x1xi32>
    %16 = arith.select %13, %15, %4 : vector<128x1xi1>, vector<128x1xi32>
    %c0_i32_3 = arith.constant 0 : i32
    %17 = vector.broadcast %c0_i32_3 : i32 to vector<128x1xi32>
    %18 = arith.cmpi ne, %16, %17 : vector<128x1xi32>
    %c15_i32 = arith.constant 15 : i32
    %19 = vector.broadcast %c15_i32 : i32 to vector<128x1xi32>
    %20 = arith.cmpi ne, %16, %19 : vector<128x1xi32>
    %c0 = arith.constant 0 : index
    %c0_4 = arith.constant 0 : index
    %21 = vector.load %arg1[%c0, %c0_4] : memref<128x128xf32, #tpu.memory_space<vmem>>, vector<128x128xf32>
    %c1_i32_5 = arith.constant 1 : i32
    %22 = tpu.dynamic_rotate %21 by %c1_i32_5 dim 0 : vector<128x128xf32>, i32 -> vector<128x128xf32>
    %cst = arith.constant 0.000000e+00 : f32
    %23 = vector.shape_cast %18 : vector<128x1xi1> to vector<128x1xi1>
    %24 = vector.broadcast %23 : vector<128x1xi1> to vector<128x128xi1>
    %25 = vector.broadcast %cst : f32 to vector<128x128xf32>
    %26 = arith.select %24, %22, %25 : vector<128x128xi1>, vector<128x128xf32>
    %c127_i32 = arith.constant 127 : i32
    %27 = tpu.dynamic_rotate %21 by %c127_i32 dim 0 : vector<128x128xf32>, i32 -> vector<128x128xf32>
    %cst_6 = arith.constant 0.000000e+00 : f32
    %28 = vector.shape_cast %20 : vector<128x1xi1> to vector<128x1xi1>
    %29 = vector.broadcast %28 : vector<128x1xi1> to vector<128x128xi1>
    %30 = vector.broadcast %cst_6 : f32 to vector<128x128xf32>
    %31 = arith.select %29, %27, %30 : vector<128x128xi1>, vector<128x128xf32>
    %32 = arith.truncf %26 : vector<128x128xf32> to vector<128x128xbf16>
    %c0_7 = arith.constant 0 : index
    %c0_8 = arith.constant 0 : index
    %c0_9 = arith.constant 0 : index
    %33 = vector.load %arg2[%c0_7, %c0_8, %c0_9] : memref<3x128x128xbf16, #tpu.memory_space<vmem>>, vector<1x128x128xbf16>
    %34 = vector.shape_cast %33 : vector<1x128x128xbf16> to vector<128x128xbf16>
    %cst_10 = arith.constant dense<0.000000e+00> : vector<128x128xf32>
    %35 = tpu.matmul %32, %34, %cst_10 {dimension_numbers = #tpu.dot_dimension_numbers<[1], [0], [0], [1], [0, 0, 1, 1], [], []>} : vector<128x128xbf16>, vector<128x128xbf16>, vector<128x128xf32> -> vector<128x128xf32>
    %36 = arith.truncf %21 : vector<128x128xf32> to vector<128x128xbf16>
    %c1 = arith.constant 1 : index
    %c0_11 = arith.constant 0 : index
    %c0_12 = arith.constant 0 : index
    %37 = vector.load %arg2[%c1, %c0_11, %c0_12] : memref<3x128x128xbf16, #tpu.memory_space<vmem>>, vector<1x128x128xbf16>
    %38 = vector.shape_cast %37 : vector<1x128x128xbf16> to vector<128x128xbf16>
    %cst_13 = arith.constant dense<0.000000e+00> : vector<128x128xf32>
    %39 = tpu.matmul %36, %38, %cst_13 {dimension_numbers = #tpu.dot_dimension_numbers<[1], [0], [0], [1], [0, 0, 1, 1], [], []>} : vector<128x128xbf16>, vector<128x128xbf16>, vector<128x128xf32> -> vector<128x128xf32>
    %40 = arith.addf %35, %39 : vector<128x128xf32>
    %41 = arith.truncf %31 : vector<128x128xf32> to vector<128x128xbf16>
    %c2 = arith.constant 2 : index
    %c0_14 = arith.constant 0 : index
    %c0_15 = arith.constant 0 : index
    %42 = vector.load %arg2[%c2, %c0_14, %c0_15] : memref<3x128x128xbf16, #tpu.memory_space<vmem>>, vector<1x128x128xbf16>
    %43 = vector.shape_cast %42 : vector<1x128x128xbf16> to vector<128x128xbf16>
    %cst_16 = arith.constant dense<0.000000e+00> : vector<128x128xf32>
    %44 = tpu.matmul %41, %43, %cst_16 {dimension_numbers = #tpu.dot_dimension_numbers<[1], [0], [0], [1], [0, 0, 1, 1], [], []>} : vector<128x128xbf16>, vector<128x128xbf16>, vector<128x128xf32> -> vector<128x128xf32>
    %45 = arith.addf %40, %44 : vector<128x128xf32>
    %c0_17 = arith.constant 0 : index
    %c0_18 = arith.constant 0 : index
    %46 = vector.load %arg3[%c0_17, %c0_18] : memref<1x128xf32, #tpu.memory_space<vmem>>, vector<1x128xf32>
    %47 = vector.broadcast %46 : vector<1x128xf32> to vector<128x128xf32>
    %48 = arith.addf %45, %47 : vector<128x128xf32>
    %cst_19 = arith.constant 0.000000e+00 : f32
    %49 = vector.broadcast %cst_19 : f32 to vector<128x128xf32>
    %50 = arith.cmpf ogt, %48, %49 : vector<128x128xf32>
    %cst_20 = arith.constant 0.00999999977 : f32
    %51 = vector.broadcast %cst_20 : f32 to vector<128x128xf32>
    %52 = arith.mulf %51, %48 : vector<128x128xf32>
    %53 = arith.select %50, %48, %52 : vector<128x128xi1>, vector<128x128xf32>
    %c1_i32_21 = arith.constant 1 : i32
    %54 = tpu.dynamic_rotate %53 by %c1_i32_21 dim 0 : vector<128x128xf32>, i32 -> vector<128x128xf32>
    %cst_22 = arith.constant 0.000000e+00 : f32
    %55 = vector.shape_cast %18 : vector<128x1xi1> to vector<128x1xi1>
    %56 = vector.broadcast %55 : vector<128x1xi1> to vector<128x128xi1>
    %57 = vector.broadcast %cst_22 : f32 to vector<128x128xf32>
    %58 = arith.select %56, %54, %57 : vector<128x128xi1>, vector<128x128xf32>
    %c127_i32_23 = arith.constant 127 : i32
    %59 = tpu.dynamic_rotate %53 by %c127_i32_23 dim 0 : vector<128x128xf32>, i32 -> vector<128x128xf32>
    %cst_24 = arith.constant 0.000000e+00 : f32
    %60 = vector.shape_cast %20 : vector<128x1xi1> to vector<128x1xi1>
    %61 = vector.broadcast %60 : vector<128x1xi1> to vector<128x128xi1>
    %62 = vector.broadcast %cst_24 : f32 to vector<128x128xf32>
    %63 = arith.select %61, %59, %62 : vector<128x128xi1>, vector<128x128xf32>
    %64 = arith.truncf %58 : vector<128x128xf32> to vector<128x128xbf16>
    %c0_25 = arith.constant 0 : index
    %c0_26 = arith.constant 0 : index
    %c0_27 = arith.constant 0 : index
    %65 = vector.load %arg4[%c0_25, %c0_26, %c0_27] : memref<3x128x128xbf16, #tpu.memory_space<vmem>>, vector<1x128x128xbf16>
    %66 = vector.shape_cast %65 : vector<1x128x128xbf16> to vector<128x128xbf16>
    %cst_28 = arith.constant dense<0.000000e+00> : vector<128x128xf32>
    %67 = tpu.matmul %64, %66, %cst_28 {dimension_numbers = #tpu.dot_dimension_numbers<[1], [0], [0], [1], [0, 0, 1, 1], [], []>} : vector<128x128xbf16>, vector<128x128xbf16>, vector<128x128xf32> -> vector<128x128xf32>
    %68 = arith.truncf %53 : vector<128x128xf32> to vector<128x128xbf16>
    %c1_29 = arith.constant 1 : index
    %c0_30 = arith.constant 0 : index
    %c0_31 = arith.constant 0 : index
    %69 = vector.load %arg4[%c1_29, %c0_30, %c0_31] : memref<3x128x128xbf16, #tpu.memory_space<vmem>>, vector<1x128x128xbf16>
    %70 = vector.shape_cast %69 : vector<1x128x128xbf16> to vector<128x128xbf16>
    %cst_32 = arith.constant dense<0.000000e+00> : vector<128x128xf32>
    %71 = tpu.matmul %68, %70, %cst_32 {dimension_numbers = #tpu.dot_dimension_numbers<[1], [0], [0], [1], [0, 0, 1, 1], [], []>} : vector<128x128xbf16>, vector<128x128xbf16>, vector<128x128xf32> -> vector<128x128xf32>
    %72 = arith.addf %67, %71 : vector<128x128xf32>
    %73 = arith.truncf %63 : vector<128x128xf32> to vector<128x128xbf16>
    %c2_33 = arith.constant 2 : index
    %c0_34 = arith.constant 0 : index
    %c0_35 = arith.constant 0 : index
    %74 = vector.load %arg4[%c2_33, %c0_34, %c0_35] : memref<3x128x128xbf16, #tpu.memory_space<vmem>>, vector<1x128x128xbf16>
    %75 = vector.shape_cast %74 : vector<1x128x128xbf16> to vector<128x128xbf16>
    %cst_36 = arith.constant dense<0.000000e+00> : vector<128x128xf32>
    %76 = tpu.matmul %73, %75, %cst_36 {dimension_numbers = #tpu.dot_dimension_numbers<[1], [0], [0], [1], [0, 0, 1, 1], [], []>} : vector<128x128xbf16>, vector<128x128xbf16>, vector<128x128xf32> -> vector<128x128xf32>
    %77 = arith.addf %72, %76 : vector<128x128xf32>
    %c0_37 = arith.constant 0 : index
    %c0_38 = arith.constant 0 : index
    %78 = vector.load %arg5[%c0_37, %c0_38] : memref<1x128xf32, #tpu.memory_space<vmem>>, vector<1x128xf32>
    %79 = vector.broadcast %78 : vector<1x128xf32> to vector<128x128xf32>
    %80 = arith.addf %77, %79 : vector<128x128xf32>
    %81 = arith.addf %80, %21 : vector<128x128xf32>
    %cst_39 = arith.constant 0.000000e+00 : f32
    %82 = vector.broadcast %cst_39 : f32 to vector<128x128xf32>
    %83 = arith.cmpf ogt, %81, %82 : vector<128x128xf32>
    %cst_40 = arith.constant 0.00999999977 : f32
    %84 = vector.broadcast %cst_40 : f32 to vector<128x128xf32>
    %85 = arith.mulf %84, %81 : vector<128x128xf32>
    %86 = arith.select %83, %81, %85 : vector<128x128xi1>, vector<128x128xf32>
    %c0_41 = arith.constant 0 : index
    %c0_42 = arith.constant 0 : index
    %87 = vector.load %arg6[%c0_41, %c0_42] : memref<128x128xf32, #tpu.memory_space<vmem>>, vector<128x128xf32>
    tpu.vector_store %arg6[%c0_41, %c0_42], %86 {strides = array<i32>} : memref<128x128xf32, #tpu.memory_space<vmem>>, vector<128x128xf32>,
    return
  }
  func.func @transform_0(%arg0: i32) -> (i32, i32) {
    %c0_i32 = arith.constant 0 : i32
    %c0_i32_0 = arith.constant 0 : i32
    return %arg0, %c0_i32 : i32, i32
  }
  func.func @transform_1(%arg0: i32) -> (i32, i32, i32) {
    %c0_i32 = arith.constant 0 : i32
    %c0_i32_0 = arith.constant 0 : i32
    %c0_i32_1 = arith.constant 0 : i32
    %c0_i32_2 = arith.constant 0 : i32
    return %c0_i32, %c0_i32_0, %c0_i32_1 : i32, i32, i32
  }
  func.func @transform_2(%arg0: i32) -> (i32, i32) {
    %c0_i32 = arith.constant 0 : i32
    %c0_i32_0 = arith.constant 0 : i32
    %c0_i32_1 = arith.constant 0 : i32
    return %c0_i32, %c0_i32_0 : i32, i32
  }
  func.func @transform_3(%arg0: i32) -> (i32, i32, i32) {
    %c0_i32 = arith.constant 0 : i32
    %c0_i32_0 = arith.constant 0 : i32
    %c0_i32_1 = arith.constant 0 : i32
    %c0_i32_2 = arith.constant 0 : i32
    return %c0_i32, %c0_i32_0, %c0_i32_1 : i32, i32, i32
  }
  func.func @transform_4(%arg0: i32) -> (i32, i32) {
    %c0_i32 = arith.constant 0 : i32
    %c0_i32_0 = arith.constant 0 : i32
    %c0_i32_1 = arith.constant 0 : i32
    return %c0_i32, %c0_i32_0 : i32, i32
  }
  func.func @transform_5(%arg0: i32) -> (i32, i32) {
    %c0_i32 = arith.constant 0 : i32
    %c0_i32_0 = arith.constant 0 : i32
    return %arg0, %c0_i32 : i32, i32
  }
}

</mosaic_0001>

<llo_original>
// kernel: basic_block_pallas.1
$region0: #{basic_block_pallas.1}
  #allocation0 [shape = 'u32[]', space=smem, size = 0x4, offset = 0x4, fixed_abs, tag = 'smem constant byte address 0x4 - core index']
  #allocation1 [shape = 'u32[144,128]{1,0:T(1,128)}', space=vmem, size = 0x12000, scoped, tag = 'internal scratch']
  %s0 = inlined_call_operand.vmem [shape: f32[256,128], index: 0, kind: input, shape index: {}]
  %s1 = inlined_call_operand.vmem [shape: bf16[3,128,128], index: 1, kind: input, shape index: {}]
  %s2 = inlined_call_operand.vmem [shape: f32[1,128], index: 2, kind: input, shape index: {}]
  %s3 = inlined_call_operand.vmem [shape: bf16[3,128,128], index: 3, kind: input, shape index: {}]
  %s4 = inlined_call_operand.vmem [shape: f32[1,128], index: 4, kind: input, shape index: {}]
  %s5 = inlined_call_operand.vmem [shape: f32[256,128], index: 5, kind: output, shape index: {}]
  %s6 = sld [smem:[#allocation0]]
  $region53: #{basic_block_pallas.1} parent=0
    _
  %s8 = ssub.s32 1, %s6
  %s9 = scalar_select 0, %s8, %s6
  loop: start=0, step=1, limit=4
  $region2: #{basic_block_pallas.1} parent=0 // loop_pre_header
    _
  $region3: #{basic_block_pallas.1} parent=0 // loop_header
    %s11 = sphi 0, %s15
    %p12 = scmp.ge.s32.totalorder %s11, 4
    %s21 = sphi 0, %s23
    %s24 = sphi 0, %s21
    %s25 = sphi 0, %s24
    %s41 = sphi 0, %s25
    %s45 = sphi 0, %s45
    %s47 = sphi 0, %s45
    %s48 = sphi 0, %s47
    %s62 = sphi 0, %s48
    %s66 = sphi 0, %s66
    %s68 = sphi 0, %s66
    %s69 = sphi 0, %s68
    %s83 = sphi 0, %s69
    %s87 = sphi 0, %s87
    %s89 = sphi 0, %s87
    %s90 = sphi 0, %s89
    %s104 = sphi 0, %s90
    %s108 = sphi 0, %s108
    %s110 = sphi 0, %s108
    %s111 = sphi 0, %s110
    %s125 = sphi 0, %s111
    %s131 = sphi 0, %s133
    %s134 = sphi 0, %s131
    %s135 = sphi 0, %s134
    %s151 = sphi 0, %s135
  $region4: #{basic_block_pallas.1} parent=0 // loop_header_branch
    %14 = sbr.rel (%p12) target = $region8
  $region5: #{basic_block_pallas.1} parent=0 // loop_body
    %s16 = ssub.s32 %s11, 1
    %s17 = ssub.s32 %s11, 2
    %s18 = sadd.s32 %s11, 1
    %s19 = ssub.s32 %s11, %s18
    %p20 = scmp.eq.s32.totalorder %s19, 0
    %s22 = sadd.s32 %s21, 1
    %s23 = scalar_select %p20, %s21, %s22
    %p26 = pneg %p20
    %p27 = scmp.eq.s32.totalorder %s11, 1
    %p28 = por %p26, %p27
    %p29 = scmp.ne.s32.totalorder %s21, %s24
    %p30 = scmp.eq.s32.totalorder %s11, 0
    %p31 = por %p29, %p30
    %p32 = scmp.ne.s32.totalorder %s21, %s24
    %p33 = scmp.eq.s32.totalorder %s16, 1
    %p34 = por %p32, %p33
    %p35 = scmp.ne.s32.totalorder %s24, %s25
    %p36 = scmp.eq.s32.totalorder %s16, 0
    %p37 = por %p35, %p36
    %p38 = scmp.ne.s32.totalorder %s24, %s25
    %p39 = scmp.eq.s32.totalorder %s17, 1
    %p40 = por %p38, %p39
    %p42 = scmp.ne.s32.totalorder %s25, %s41
    %p43 = scmp.eq.s32.totalorder %s17, 0
    %p44 = por %p42, %p43
    %s46 = sadd.s32 %s45, 1
    %p49 = scmp.eq.s32.totalorder %s11, 1
    %p50 = scmp.ne.s32.totalorder %s45, %s47
    %p51 = scmp.eq.s32.totalorder %s11, 0
    %p52 = por %p50, %p51
    %p53 = scmp.ne.s32.totalorder %s45, %s47
    %p54 = scmp.eq.s32.totalorder %s16, 1
    %p55 = por %p53, %p54
    %p56 = scmp.ne.s32.totalorder %s47, %s48
    %p57 = scmp.eq.s32.totalorder %s16, 0
    %p58 = por %p56, %p57
    %p59 = scmp.ne.s32.totalorder %s47, %s48
    %p60 = scmp.eq.s32.totalorder %s17, 1
    %p61 = por %p59, %p60
    %p63 = scmp.ne.s32.totalorder %s48, %s62
    %p64 = scmp.eq.s32.totalorder %s17, 0
    %p65 = por %p63, %p64
    %s67 = sadd.s32 %s66, 1
    %p70 = scmp.eq.s32.totalorder %s11, 1
    %p71 = scmp.ne.s32.totalorder %s66, %s68
    %p72 = scmp.eq.s32.totalorder %s11, 0
    %p73 = por %p71, %p72
    %p74 = scmp.ne.s32.totalorder %s66, %s68
    %p75 = scmp.eq.s32.totalorder %s16, 1
    %p76 = por %p74, %p75
    %p77 = scmp.ne.s32.totalorder %s68, %s69
    %p78 = scmp.eq.s32.totalorder %s16, 0
    %p79 = por %p77, %p78
    %p80 = scmp.ne.s32.totalorder %s68, %s69
    %p81 = scmp.eq.s32.totalorder %s17, 1
    %p82 = por %p80, %p81
    %p84 = scmp.ne.s32.totalorder %s69, %s83
    %p85 = scmp.eq.s32.totalorder %s17, 0
    %p86 = por %p84, %p85
    %s88 = sadd.s32 %s87, 1
    %p91 = scmp.eq.s32.totalorder %s11, 1
    %p92 = scmp.ne.s32.totalorder %s87, %s89
    %p93 = scmp.eq.s32.totalorder %s11, 0
    %p94 = por %p92, %p93
    %p95 = scmp.ne.s32.totalorder %s87, %s89
    %p96 = scmp.eq.s32.totalorder %s16, 1
    %p97 = por %p95, %p96
    %p98 = scmp.ne.s32.totalorder %s89, %s90
    %p99 = scmp.eq.s32.totalorder %s16, 0
    %p100 = por %p98, %p99
    %p101 = scmp.ne.s32.totalorder %s89, %s90
    %p102 = scmp.eq.s32.totalorder %s17, 1
    %p103 = por %p101, %p102
    %p105 = scmp.ne.s32.totalorder %s90, %s104
    %p106 = scmp.eq.s32.totalorder %s17, 0
    %p107 = por %p105, %p106
    %s109 = sadd.s32 %s108, 1
    %p112 = scmp.eq.s32.totalorder %s11, 1
    %p113 = scmp.ne.s32.totalorder %s108, %s110
    %p114 = scmp.eq.s32.totalorder %s11, 0
    %p115 = por %p113, %p114
    %p116 = scmp.ne.s32.totalorder %s108, %s110
    %p117 = scmp.eq.s32.totalorder %s16, 1
    %p118 = por %p116, %p117
    %p119 = scmp.ne.s32.totalorder %s110, %s111
    %p120 = scmp.eq.s32.totalorder %s16, 0
    %p121 = por %p119, %p120
    %p122 = scmp.ne.s32.totalorder %s110, %s111
    %p123 = scmp.eq.s32.totalorder %s17, 1
    %p124 = por %p122, %p123
    %p126 = scmp.ne.s32.totalorder %s111, %s125
    %p127 = scmp.eq.s32.totalorder %s17, 0
    %p128 = por %p126, %p127
    %s129 = ssub.s32 %s11, %s18
    %p130 = scmp.eq.s32.totalorder %s129, 0
    %s132 = sadd.s32 %s131, 1
    %s133 = scalar_select %p130, %s131, %s132
    %p136 = pneg %p130
    %p137 = scmp.eq.s32.totalorder %s11, 1
    %p138 = por %p136, %p137
    %p139 = scmp.ne.s32.totalorder %s131, %s134
    %p140 = scmp.eq.s32.totalorder %s11, 0
    %p141 = por %p139, %p140
    %p142 = scmp.ne.s32.totalorder %s131, %s134
    %p143 = scmp.eq.s32.totalorder %s16, 1
    %p144 = por %p142, %p143
    %p145 = scmp.ne.s32.totalorder %s134, %s135
    %p146 = scmp.eq.s32.totalorder %s16, 0
    %p147 = por %p145, %p146
    %p148 = scmp.ne.s32.totalorder %s134, %s135
    %p149 = scmp.eq.s32.totalorder %s17, 1
    %p150 = por %p148, %p149
    %p152 = scmp.ne.s32.totalorder %s135, %s151
    %p153 = scmp.eq.s32.totalorder %s17, 0
    %p154 = por %p152, %p153
    %p155 = scmp.le.s32.totalorder 1, %s11
    %p156 = scmp.lt.s32.totalorder %s11, 3
    %p157 = pnand %p155, %p156
    %p158 = pneg %p157
    // Predicated region
    $region9: #{basic_block_pallas.1} parent=5 // pred_check
      _
    $region10: #{basic_block_pallas.1} parent=5 // pred_check_branch
      %160 = sbr.rel (%p157) target = $region12
    $region11: #{basic_block_pallas.1} parent=5 // pred_region
      %s161 = ssub.s32 %s11, 1
      // Predicated region
      $region13: #{basic_block_pallas.1} parent=11 // pred_check
        %p162 = pneg %p58
      $region14: #{basic_block_pallas.1} parent=11 // pred_check_branch
        %164 = sbr.rel (%p162) target = $region16
      $region15: #{basic_block_pallas.1} parent=11 // pred_region
        _
      $region16: #{basic_block_pallas.1} parent=11 // pred_fallthru
        _
      // Predicated region
      $region17: #{basic_block_pallas.1} parent=11 // pred_check
        %p165 = pneg %p79
      $region18: #{basic_block_pallas.1} parent=11 // pred_check_branch
        %167 = sbr.rel (%p165) target = $region20
      $region19: #{basic_block_pallas.1} parent=11 // pred_region
        _
      $region20: #{basic_block_pallas.1} parent=11 // pred_fallthru
        _
      // Predicated region
      $region21: #{basic_block_pallas.1} parent=11 // pred_check
        %p168 = pneg %p100
      $region22: #{basic_block_pallas.1} parent=11 // pred_check_branch
        %170 = sbr.rel (%p168) target = $region24
      $region23: #{basic_block_pallas.1} parent=11 // pred_region
        _
      $region24: #{basic_block_pallas.1} parent=11 // pred_fallthru
        _
      // Predicated region
      $region25: #{basic_block_pallas.1} parent=11 // pred_check
        %p171 = pneg %p121
      $region26: #{basic_block_pallas.1} parent=11 // pred_check_branch
        %173 = sbr.rel (%p171) target = $region28
      $region27: #{basic_block_pallas.1} parent=11 // pred_region
        _
      $region28: #{basic_block_pallas.1} parent=11 // pred_fallthru
        _
    $region12: #{basic_block_pallas.1} parent=5 // pred_fallthru
      _
    %p174 = scmp.lt.s32.totalorder %s11, 2
    // Predicated region
    $region29: #{basic_block_pallas.1} parent=5 // pred_check
      %p175 = pneg %p174
    $region30: #{basic_block_pallas.1} parent=5 // pred_check_branch
      %177 = sbr.rel (%p175) target = $region32
    $region31: #{basic_block_pallas.1} parent=5 // pred_region
      // Predicated region
      $region33: #{basic_block_pallas.1} parent=31 // pred_check
        %p178 = pneg %p31
      $region34: #{basic_block_pallas.1} parent=31 // pred_check_branch
        %180 = sbr.rel (%p178) target = $region36
      $region35: #{basic_block_pallas.1} parent=31 // pred_region
        %s181 = smul.u32 16, %s11
        %p182 = scmp.lt.s32.totalorder %s181, 31
        %s183 = scalar_select %p182, %s181, 31
        %s184 = smul.addr %s183, 8
        %s185 = scalar_lea.vmem %s0, %s184
        %s186 = smul.u32 16, %s11
      $region36: #{basic_block_pallas.1} parent=31 // pred_fallthru
        _
    $region32: #{basic_block_pallas.1} parent=5 // pred_fallthru
      _
    %p187 = scmp.le.s32.totalorder 1, %s11
    %p188 = scmp.lt.s32.totalorder %s11, 3
    %p189 = pnand %p187, %p188
    %p190 = pneg %p189
    // Predicated region
    $region37: #{basic_block_pallas.1} parent=5 // pred_check
      _
    $region38: #{basic_block_pallas.1} parent=5 // pred_check_branch
      %192 = sbr.rel (%p189) target = $region40
    $region39: #{basic_block_pallas.1} parent=5 // pred_region
      %s193 = ssub.s32 %s11, 1
      %s194 = smul.u32 16, %s16
      %p195 = scmp.lt.s32.totalorder %s194, 31
      %s196 = scalar_select %p195, %s194, 31
      %s197 = smul.addr %s196, 8
      %s198 = scalar_lea.vmem %s0, %s197
      %p199 = pneg %p37
      %p200 = pneg %p34
      %p201 = pneg %p58
      %p202 = pneg %p55
      %p203 = pneg %p79
      %p204 = pneg %p76
      %p205 = pneg %p100
      %p206 = pneg %p97
      %p207 = pneg %p121
      %p208 = pneg %p118
      %p209 = pneg %p147
      %p210 = pneg %p144
      %s211 = smul.u32 16, %s16
      %p212 = scmp.lt.s32.totalorder %s211, 31
      %s213 = scalar_select %p212, %s211, 31
      %s214 = smul.addr %s213, 8
      %s215 = scalar_lea.vmem %s5, %s214
      %s216 = smul.u32 16, %s16
      %p217 = scmp.lt.s32.totalorder %s216, 31
      %s218 = scalar_select %p217, %s216, 31
      %s219 = smul.addr %s218, 8
      %s220 = scalar_lea.vmem %s0, %s219
      %s221 = smul.u32 16, %s16
      %s222 = smul.u32 16, %s16
      %p223 = scmp.lt.s32.totalorder %s222, 31
      %s224 = scalar_select %p223, %s222, 31
      %s225 = smul.addr %s224, 8
      %s226 = scalar_lea.vmem %s5, %s225
      %s227 = smul.u32 16, %s16
      %v229 = vlaneseq
      %v230 = vshrl.u32 %v229, 7
      %v231 = vadd.s32 %v230, 8
      %v232 = vadd.s32 %v230, 16
      %v233 = vadd.s32 %v230, 24
      %v234 = vadd.s32 %v230, 32
      %v235 = vadd.s32 %v230, 40
      %v236 = vadd.s32 %v230, 48
      %v237 = vadd.s32 %v230, 56
      %v238 = vadd.s32 %v230, 64
      %v239 = vadd.s32 %v230, 72
      %v240 = vadd.s32 %v230, 80
      %v241 = vadd.s32 %v230, 88
      %v242 = vadd.s32 %v230, 96
      %v243 = vadd.s32 %v230, 104
      %v244 = vadd.s32 %v230, 112
      %v245 = vadd.s32 %v230, 120
      %vm246 = vcmp.lt.s32.totalorder %v230, 0
      %v247 = vsub.s32 0, %v230
      %v248 = vsel %vm246, %v247, %v230
      %v249 = vshrl.u32 %v248, 4
      %v250 = vand.u32 %v248, 15
      %v251 = vsub.s32 0, %v250
      %v252 = vsel %vm246, %v251, %v250
      %vm253 = vcmp.lt.s32.totalorder %v231, 0
      %v254 = vsub.s32 0, %v231
      %v255 = vsel %vm253, %v254, %v231
      %v256 = vshrl.u32 %v255, 4
      %v257 = vand.u32 %v255, 15
      %v258 = vsub.s32 0, %v257
      %v259 = vsel %vm253, %v258, %v257
      %vm260 = vcmp.lt.s32.totalorder %v232, 0
      %v261 = vsub.s32 0, %v232
      %v262 = vsel %vm260, %v261, %v232
      %v263 = vshrl.u32 %v262, 4
      %v264 = vand.u32 %v262, 15
      %v265 = vsub.s32 0, %v264
      %v266 = vsel %vm260, %v265, %v264
      %vm267 = vcmp.lt.s32.totalorder %v233, 0
      %v268 = vsub.s32 0, %v233
      %v269 = vsel %vm267, %v268, %v233
      %v270 = vshrl.u32 %v269, 4
      %v271 = vand.u32 %v269, 15
      %v272 = vsub.s32 0, %v271
      %v273 = vsel %vm267, %v272, %v271
      %vm274 = vcmp.lt.s32.totalorder %v234, 0
      %v275 = vsub.s32 0, %v234
      %v276 = vsel %vm274, %v275, %v234
      %v277 = vshrl.u32 %v276, 4
      %v278 = vand.u32 %v276, 15
      %v279 = vsub.s32 0, %v278
      %v280 = vsel %vm274, %v279, %v278
      %vm281 = vcmp.lt.s32.totalorder %v235, 0
      %v282 = vsub.s32 0, %v235
      %v283 = vsel %vm281, %v282, %v235
      %v284 = vshrl.u32 %v283, 4
      %v285 = vand.u32 %v283, 15
      %v286 = vsub.s32 0, %v285
      %v287 = vsel %vm281, %v286, %v285
      %vm288 = vcmp.lt.s32.totalorder %v236, 0
      %v289 = vsub.s32 0, %v236
      %v290 = vsel %vm288, %v289, %v236
      %v291 = vshrl.u32 %v290, 4
      %v292 = vand.u32 %v290, 15
      %v293 = vsub.s32 0, %v292
      %v294 = vsel %vm288, %v293, %v292
      %vm295 = vcmp.lt.s32.totalorder %v237, 0
      %v296 = vsub.s32 0, %v237
      %v297 = vsel %vm295, %v296, %v237
      %v298 = vshrl.u32 %v297, 4
      %v299 = vand.u32 %v297, 15
      %v300 = vsub.s32 0, %v299
      %v301 = vsel %vm295, %v300, %v299
      %vm302 = vcmp.lt.s32.totalorder %v238, 0
      %v303 = vsub.s32 0, %v238
      %v304 = vsel %vm302, %v303, %v238
      %v305 = vshrl.u32 %v304, 4
      %v306 = vand.u32 %v304, 15
      %v307 = vsub.s32 0, %v306
      %v308 = vsel %vm302, %v307, %v306
      %vm309 = vcmp.lt.s32.totalorder %v239, 0
      %v310 = vsub.s32 0, %v239
      %v311 = vsel %vm309, %v310, %v239
      %v312 = vshrl.u32 %v311, 4
      %v313 = vand.u32 %v311, 15
      %v314 = vsub.s32 0, %v313
      %v315 = vsel %vm309, %v314, %v313
      %vm316 = vcmp.lt.s32.totalorder %v240, 0
      %v317 = vsub.s32 0, %v240
      %v318 = vsel %vm316, %v317, %v240
      %v319 = vshrl.u32 %v318, 4
      %v320 = vand.u32 %v318, 15
      %v321 = vsub.s32 0, %v320
      %v322 = vsel %vm316, %v321, %v320
      %vm323 = vcmp.lt.s32.totalorder %v241, 0
      %v324 = vsub.s32 0, %v241
      %v325 = vsel %vm323, %v324, %v241
      %v326 = vshrl.u32 %v325, 4
      %v327 = vand.u32 %v325, 15
      %v328 = vsub.s32 0, %v327
      %v329 = vsel %vm323, %v328, %v327
      %vm330 = vcmp.lt.s32.totalorder %v242, 0
      %v331 = vsub.s32 0, %v242
      %v332 = vsel %vm330, %v331, %v242
      %v333 = vshrl.u32 %v332, 4
      %v334 = vand.u32 %v332, 15
      %v335 = vsub.s32 0, %v334
      %v336 = vsel %vm330, %v335, %v334
      %vm337 = vcmp.lt.s32.totalorder %v243, 0
      %v338 = vsub.s32 0, %v243
      %v339 = vsel %vm337, %v338, %v243
      %v340 = vshrl.u32 %v339, 4
      %v341 = vand.u32 %v339, 15
      %v342 = vsub.s32 0, %v341
      %v343 = vsel %vm337, %v342, %v341
      %vm344 = vcmp.lt.s32.totalorder %v244, 0
      %v345 = vsub.s32 0, %v244
      %v346 = vsel %vm344, %v345, %v244
      %v347 = vshrl.u32 %v346, 4
      %v348 = vand.u32 %v346, 15
      %v349 = vsub.s32 0, %v348
      %v350 = vsel %vm344, %v349, %v348
      %vm351 = vcmp.lt.s32.totalorder %v245, 0
      %v352 = vsub.s32 0, %v245
      %v353 = vsel %vm351, %v352, %v245
      %v354 = vshrl.u32 %v353, 4
      %v355 = vand.u32 %v353, 15
      %v356 = vsub.s32 0, %v355
      %v357 = vsel %vm351, %v356, %v355
      %vm358 = vcmp.ne.s32.totalorder %v252, 0
      %vm359 = vcmp.ne.s32.totalorder %v259, 0
      %vm360 = vcmp.ne.s32.totalorder %v266, 0
      %vm361 = vcmp.ne.s32.totalorder %v273, 0
      %vm362 = vcmp.ne.s32.totalorder %v280, 0
      %vm363 = vcmp.ne.s32.totalorder %v287, 0
      %vm364 = vcmp.ne.s32.totalorder %v294, 0
      %vm365 = vcmp.ne.s32.totalorder %v301, 0
      %vm366 = vcmp.ne.s32.totalorder %v308, 0
      %vm367 = vcmp.ne.s32.totalorder %v315, 0
      %vm368 = vcmp.ne.s32.totalorder %v322, 0
      %vm369 = vcmp.ne.s32.totalorder %v329, 0
      %vm370 = vcmp.ne.s32.totalorder %v336, 0
      %vm371 = vcmp.ne.s32.totalorder %v343, 0
      %vm372 = vcmp.ne.s32.totalorder %v350, 0
      %vm373 = vcmp.ne.s32.totalorder %v357, 0
      %vm374 = vcmp.lt.s32.totalorder %v252, 0
      %vm375 = vcmp.lt.s32.totalorder %v259, 0
      %vm376 = vcmp.lt.s32.totalorder %v266, 0
      %vm377 = vcmp.lt.s32.totalorder %v273, 0
      %vm378 = vcmp.lt.s32.totalorder %v280, 0
      %vm379 = vcmp.lt.s32.totalorder %v287, 0
      %vm380 = vcmp.lt.s32.totalorder %v294, 0
      %vm381 = vcmp.lt.s32.totalorder %v301, 0
      %vm382 = vcmp.lt.s32.totalorder %v308, 0
      %vm383 = vcmp.lt.s32.totalorder %v315, 0
      %vm384 = vcmp.lt.s32.totalorder %v322, 0
      %vm385 = vcmp.lt.s32.totalorder %v329, 0
      %vm386 = vcmp.lt.s32.totalorder %v336, 0
      %vm387 = vcmp.lt.s32.totalorder %v343, 0
      %vm388 = vcmp.lt.s32.totalorder %v350, 0
      %vm389 = vcmp.lt.s32.totalorder %v357, 0
      %vm390 = vmand %vm374, %vm358
      %vm391 = vmand %vm375, %vm359
      %vm392 = vmand %vm376, %vm360
      %vm393 = vmand %vm377, %vm361
      %vm394 = vmand %vm378, %vm362
      %vm395 = vmand %vm379, %vm363
      %vm396 = vmand %vm380, %vm364
      %vm397 = vmand %vm381, %vm365
      %vm398 = vmand %vm382, %vm366
      %vm399 = vmand %vm383, %vm367
      %vm400 = vmand %vm384, %vm368
      %vm401 = vmand %vm385, %vm369
      %vm402 = vmand %vm386, %vm370
      %vm403 = vmand %vm387, %vm371
      %vm404 = vmand %vm388, %vm372
      %vm405 = vmand %vm389, %vm373
      %v406 = vadd.s32 %v252, 16
      %v407 = vadd.s32 %v259, 16
      %v408 = vadd.s32 %v266, 16
      %v409 = vadd.s32 %v273, 16
      %v410 = vadd.s32 %v280, 16
      %v411 = vadd.s32 %v287, 16
      %v412 = vadd.s32 %v294, 16
      %v413 = vadd.s32 %v301, 16
      %v414 = vadd.s32 %v308, 16
      %v415 = vadd.s32 %v315, 16
      %v416 = vadd.s32 %v322, 16
      %v417 = vadd.s32 %v329, 16
      %v418 = vadd.s32 %v336, 16
      %v419 = vadd.s32 %v343, 16
      %v420 = vadd.s32 %v350, 16
      %v421 = vadd.s32 %v357, 16
      %v422 = vsel %vm390, %v406, %v252
      %v423 = vsel %vm391, %v407, %v259
      %v424 = vsel %vm392, %v408, %v266
      %v425 = vsel %vm393, %v409, %v273
      %v426 = vsel %vm394, %v410, %v280
      %v427 = vsel %vm395, %v411, %v287
      %v428 = vsel %vm396, %v412, %v294
      %v429 = vsel %vm397, %v413, %v301
      %v430 = vsel %vm398, %v414, %v308
      %v431 = vsel %vm399, %v415, %v315
      %v432 = vsel %vm400, %v416, %v322
      %v433 = vsel %vm401, %v417, %v329
      %v434 = vsel %vm402, %v418, %v336
      %v435 = vsel %vm403, %v419, %v343
      %v436 = vsel %vm404, %v420, %v350
      %v437 = vsel %vm405, %v421, %v357
      %vm438 = vcmp.ne.s32.totalorder %v422, 0
      %vm439 = vcmp.ne.s32.totalorder %v423, 0
      %vm440 = vcmp.ne.s32.totalorder %v424, 0
      %vm441 = vcmp.ne.s32.totalorder %v425, 0
      %vm442 = vcmp.ne.s32.totalorder %v426, 0
      %vm443 = vcmp.ne.s32.totalorder %v427, 0
      %vm444 = vcmp.ne.s32.totalorder %v428, 0
      %vm445 = vcmp.ne.s32.totalorder %v429, 0
      %vm446 = vcmp.ne.s32.totalorder %v430, 0
      %vm447 = vcmp.ne.s32.totalorder %v431, 0
      %vm448 = vcmp.ne.s32.totalorder %v432, 0
      %vm449 = vcmp.ne.s32.totalorder %v433, 0
      %vm450 = vcmp.ne.s32.totalorder %v434, 0
      %vm451 = vcmp.ne.s32.totalorder %v435, 0
      %vm452 = vcmp.ne.s32.totalorder %v436, 0
      %vm453 = vcmp.ne.s32.totalorder %v437, 0
      %vm454 = vcmp.ne.s32.totalorder %v422, 15
      %vm455 = vcmp.ne.s32.totalorder %v423, 15
      %vm456 = vcmp.ne.s32.totalorder %v424, 15
      %vm457 = vcmp.ne.s32.totalorder %v425, 15
      %vm458 = vcmp.ne.s32.totalorder %v426, 15
      %vm459 = vcmp.ne.s32.totalorder %v427, 15
      %vm460 = vcmp.ne.s32.totalorder %v428, 15
      %vm461 = vcmp.ne.s32.totalorder %v429, 15
      %vm462 = vcmp.ne.s32.totalorder %v430, 15
      %vm463 = vcmp.ne.s32.totalorder %v431, 15
      %vm464 = vcmp.ne.s32.totalorder %v432, 15
      %vm465 = vcmp.ne.s32.totalorder %v433, 15
      %vm466 = vcmp.ne.s32.totalorder %v434, 15
      %vm467 = vcmp.ne.s32.totalorder %v435, 15
      %vm468 = vcmp.ne.s32.totalorder %v436, 15
      %vm469 = vcmp.ne.s32.totalorder %v437, 15
      %v470 = vld [vmem:[%s220] sm:$0xff]
      %v471 = vld [vmem:[%s220 + $0x8] sm:$0xff]
      %v472 = vld [vmem:[%s220 + $0x10] sm:$0xff]
      %v473 = vld [vmem:[%s220 + $0x18] sm:$0xff]
      %v474 = vld [vmem:[%s220 + $0x20] sm:$0xff]
      %v475 = vld [vmem:[%s220 + $0x28] sm:$0xff]
      %v476 = vld [vmem:[%s220 + $0x30] sm:$0xff]
      %v477 = vld [vmem:[%s220 + $0x38] sm:$0xff]
      %v478 = vld [vmem:[%s220 + $0x40] sm:$0xff]
      %v479 = vld [vmem:[%s220 + $0x48] sm:$0xff]
      %v480 = vld [vmem:[%s220 + $0x50] sm:$0xff]
      %v481 = vld [vmem:[%s220 + $0x58] sm:$0xff]
      %v482 = vld [vmem:[%s220 + $0x60] sm:$0xff]
      %v483 = vld [vmem:[%s220 + $0x68] sm:$0xff]
      %v484 = vld [vmem:[%s220 + $0x70] sm:$0xff]
      %v485 = vld [vmem:[%s220 + $0x78] sm:$0xff]
      %v486 = vrot.slane %v470, 7
      %v487 = vrot.slane %v471, 7
      %v488 = vrot.slane %v472, 7
      %v489 = vrot.slane %v473, 7
      %v490 = vrot.slane %v474, 7
      %v491 = vrot.slane %v475, 7
      %v492 = vrot.slane %v476, 7
      %v493 = vrot.slane %v477, 7
      %v494 = vrot.slane %v478, 7
      %v495 = vrot.slane %v479, 7
      %v496 = vrot.slane %v480, 7
      %v497 = vrot.slane %v481, 7
      %v498 = vrot.slane %v482, 7
      %v499 = vrot.slane %v483, 7
      %v500 = vrot.slane %v484, 7
      %v501 = vrot.slane %v485, 7
      %vm502 = vcmp.lt.s32.totalorder %v230, 1
      %v503 = vsel %vm502, %v500, %v501
      %v504 = vsel %vm502, %v499, %v500
      %v505 = vsel %vm502, %v498, %v499
      %v506 = vsel %vm502, %v497, %v498
      %v507 = vsel %vm502, %v496, %v497
      %v508 = vsel %vm502, %v495, %v496
      %v509 = vsel %vm502, %v494, %v495
      %v510 = vsel %vm502, %v493, %v494
      %v511 = vsel %vm502, %v492, %v493
      %v512 = vsel %vm502, %v491, %v492
      %v513 = vsel %vm502, %v490, %v491
      %v514 = vsel %vm502, %v489, %v490
      %v515 = vsel %vm502, %v488, %v489
      %v516 = vsel %vm502, %v487, %v488
      %v517 = vsel %vm502, %v486, %v487
      %v518 = vsel %vm502, %v501, %v486
      %v519 = vsel %vm438, 1, 0
      %v520 = vsel %vm439, 1, 0
      %v521 = vsel %vm440, 1, 0
      %v522 = vsel %vm441, 1, 0
      %v523 = vsel %vm442, 1, 0
      %v524 = vsel %vm443, 1, 0
      %v525 = vsel %vm444, 1, 0
      %v526 = vsel %vm445, 1, 0
      %v527 = vsel %vm446, 1, 0
      %v528 = vsel %vm447, 1, 0
      %v529 = vsel %vm448, 1, 0
      %v530 = vsel %vm449, 1, 0
      %v531 = vsel %vm450, 1, 0
      %v532 = vsel %vm451, 1, 0
      %v533 = vsel %vm452, 1, 0
      %v534 = vsel %vm453, 1, 0
      %vm535 = vcmp.eq.s32.totalorder %v519, 1
      %vm536 = vcmp.eq.s32.totalorder %v520, 1
      %vm537 = vcmp.eq.s32.totalorder %v521, 1
      %vm538 = vcmp.eq.s32.totalorder %v522, 1
      %vm539 = vcmp.eq.s32.totalorder %v523, 1
      %vm540 = vcmp.eq.s32.totalorder %v524, 1
      %vm541 = vcmp.eq.s32.totalorder %v525, 1
      %vm542 = vcmp.eq.s32.totalorder %v526, 1
      %vm543 = vcmp.eq.s32.totalorder %v527, 1
      %vm544 = vcmp.eq.s32.totalorder %v528, 1
      %vm545 = vcmp.eq.s32.totalorder %v529, 1
      %vm546 = vcmp.eq.s32.totalorder %v530, 1
      %vm547 = vcmp.eq.s32.totalorder %v531, 1
      %vm548 = vcmp.eq.s32.totalorder %v532, 1
      %vm549 = vcmp.eq.s32.totalorder %v533, 1
      %vm550 = vcmp.eq.s32.totalorder %v534, 1
      %v551 = vsel %vm535, %v518, 0.0
      %v552 = vsel %vm536, %v517, 0.0
      %v553 = vsel %vm537, %v516, 0.0
      %v554 = vsel %vm538, %v515, 0.0
      %v555 = vsel %vm539, %v514, 0.0
      %v556 = vsel %vm540, %v513, 0.0
      %v557 = vsel %vm541, %v512, 0.0
      %v558 = vsel %vm542, %v511, 0.0
      %v559 = vsel %vm543, %v510, 0.0
      %v560 = vsel %vm544, %v509, 0.0
      %v561 = vsel %vm545, %v508, 0.0
      %v562 = vsel %vm546, %v507, 0.0
      %v563 = vsel %vm547, %v506, 0.0
      %v564 = vsel %vm548, %v505, 0.0
      %v565 = vsel %vm549, %v504, 0.0
      %v566 = vsel %vm550, %v503, 0.0
      %v567 = vrot.slane %v470, 1
      %v568 = vrot.slane %v471, 1
      %v569 = vrot.slane %v472, 1
      %v570 = vrot.slane %v473, 1
      %v571 = vrot.slane %v474, 1
      %v572 = vrot.slane %v475, 1
      %v573 = vrot.slane %v476, 1
      %v574 = vrot.slane %v477, 1
      %v575 = vrot.slane %v478, 1
      %v576 = vrot.slane %v479, 1
      %v577 = vrot.slane %v480, 1
      %v578 = vrot.slane %v481, 1
      %v579 = vrot.slane %v482, 1
      %v580 = vrot.slane %v483, 1
      %v581 = vrot.slane %v484, 1
      %v582 = vrot.slane %v485, 1
      %vm583 = vcmp.lt.s32.totalorder %v230, 7
      %v584 = vsel %vm583, %v581, %v582
      %v585 = vsel %vm583, %v580, %v581
      %v586 = vsel %vm583, %v579, %v580
      %v587 = vsel %vm583, %v578, %v579
      %v588 = vsel %vm583, %v577, %v578
      %v589 = vsel %vm583, %v576, %v577
      %v590 = vsel %vm583, %v575, %v576
      %v591 = vsel %vm583, %v574, %v575
      %v592 = vsel %vm583, %v573, %v574
      %v593 = vsel %vm583, %v572, %v573
      %v594 = vsel %vm583, %v571, %v572
      %v595 = vsel %vm583, %v570, %v571
      %v596 = vsel %vm583, %v569, %v570
      %v597 = vsel %vm583, %v568, %v569
      %v598 = vsel %vm583, %v567, %v568
      %v599 = vsel %vm583, %v582, %v567
      %v600 = vsel %vm454, 1, 0
      %v601 = vsel %vm455, 1, 0
      %v602 = vsel %vm456, 1, 0
      %v603 = vsel %vm457, 1, 0
      %v604 = vsel %vm458, 1, 0
      %v605 = vsel %vm459, 1, 0
      %v606 = vsel %vm460, 1, 0
      %v607 = vsel %vm461, 1, 0
      %v608 = vsel %vm462, 1, 0
      %v609 = vsel %vm463, 1, 0
      %v610 = vsel %vm464, 1, 0
      %v611 = vsel %vm465, 1, 0
      %v612 = vsel %vm466, 1, 0
      %v613 = vsel %vm467, 1, 0
      %v614 = vsel %vm468, 1, 0
      %v615 = vsel %vm469, 1, 0
      %vm616 = vcmp.eq.s32.totalorder %v600, 1
      %vm617 = vcmp.eq.s32.totalorder %v601, 1
      %vm618 = vcmp.eq.s32.totalorder %v602, 1
      %vm619 = vcmp.eq.s32.totalorder %v603, 1
      %vm620 = vcmp.eq.s32.totalorder %v604, 1
      %vm621 = vcmp.eq.s32.totalorder %v605, 1
      %vm622 = vcmp.eq.s32.totalorder %v606, 1
      %vm623 = vcmp.eq.s32.totalorder %v607, 1
      %vm624 = vcmp.eq.s32.totalorder %v608, 1
      %vm625 = vcmp.eq.s32.totalorder %v609, 1
      %vm626 = vcmp.eq.s32.totalorder %v610, 1
      %vm627 = vcmp.eq.s32.totalorder %v611, 1
      %vm628 = vcmp.eq.s32.totalorder %v612, 1
      %vm629 = vcmp.eq.s32.totalorder %v613, 1
      %vm630 = vcmp.eq.s32.totalorder %v614, 1
      %vm631 = vcmp.eq.s32.totalorder %v615, 1
      %v632 = vsel %vm616, %v598, 0.0
      %v633 = vsel %vm617, %v597, 0.0
      %v634 = vsel %vm618, %v596, 0.0
      %v635 = vsel %vm619, %v595, 0.0
      %v636 = vsel %vm620, %v594, 0.0
      %v637 = vsel %vm621, %v593, 0.0
      %v638 = vsel %vm622, %v592, 0.0
      %v639 = vsel %vm623, %v591, 0.0
      %v640 = vsel %vm624, %v590, 0.0
      %v641 = vsel %vm625, %v589, 0.0
      %v642 = vsel %vm626, %v588, 0.0
      %v643 = vsel %vm627, %v587, 0.0
      %v644 = vsel %vm628, %v586, 0.0
      %v645 = vsel %vm629, %v585, 0.0
      %v646 = vsel %vm630, %v584, 0.0
      %v647 = vsel %vm631, %v599, 0.0
      %v648 = vpack.c.bf16 %v552, %v551
      %v649 = vpack.c.bf16 %v554, %v553
      %v650 = vpack.c.bf16 %v556, %v555
      %v651 = vpack.c.bf16 %v558, %v557
      %v652 = vpack.c.bf16 %v560, %v559
      %v653 = vpack.c.bf16 %v562, %v561
      %v654 = vpack.c.bf16 %v564, %v563
      %v655 = vpack.c.bf16 %v566, %v565
      %v656 = vld [vmem:[%s1] sm:$0xf]
      %v657 = vld [vmem:[%s1 + $0x4] sm:$0xf]
      %v658 = vld [vmem:[%s1 + $0x8] sm:$0xf]
      %v659 = vld [vmem:[%s1 + $0xc] sm:$0xf]
      %v660 = vld [vmem:[%s1 + $0x10] sm:$0xf]
      %v661 = vld [vmem:[%s1 + $0x14] sm:$0xf]
      %v662 = vld [vmem:[%s1 + $0x18] sm:$0xf]
      %v663 = vld [vmem:[%s1 + $0x1c] sm:$0xf]
      %v664 = vld [vmem:[%s1 + $0x20] sm:$0xf]
      %v665 = vld [vmem:[%s1 + $0x24] sm:$0xf]
      %v666 = vld [vmem:[%s1 + $0x28] sm:$0xf]
      %v667 = vld [vmem:[%s1 + $0x2c] sm:$0xf]
      %v668 = vld [vmem:[%s1 + $0x30] sm:$0xf]
      %v669 = vld [vmem:[%s1 + $0x34] sm:$0xf]
      %v670 = vld [vmem:[%s1 + $0x38] sm:$0xf]
      %v671 = vld [vmem:[%s1 + $0x3c] sm:$0xf]
      %v672 = vpack.c.bf16 %v471, %v470
      %v673 = vpack.c.bf16 %v473, %v472
      %v674 = vpack.c.bf16 %v475, %v474
      %v675 = vpack.c.bf16 %v477, %v476
      %v676 = vpack.c.bf16 %v479, %v478
      %v677 = vpack.c.bf16 %v481, %v480
      %v678 = vpack.c.bf16 %v483, %v482
      %v679 = vpack.c.bf16 %v485, %v484
      %s680 = scalar_lea.vmem %s1, 64
      %v681 = vld [vmem:[%s680] sm:$0xf]
      %v682 = vld [vmem:[%s680 + $0x4] sm:$0xf]
      %v683 = vld [vmem:[%s680 + $0x8] sm:$0xf]
      %v684 = vld [vmem:[%s680 + $0xc] sm:$0xf]
      %v685 = vld [vmem:[%s680 + $0x10] sm:$0xf]
      %v686 = vld [vmem:[%s680 + $0x14] sm:$0xf]
      %v687 = vld [vmem:[%s680 + $0x18] sm:$0xf]
      %v688 = vld [vmem:[%s680 + $0x1c] sm:$0xf]
      %v689 = vld [vmem:[%s680 + $0x20] sm:$0xf]
      %v690 = vld [vmem:[%s680 + $0x24] sm:$0xf]
      %v691 = vld [vmem:[%s680 + $0x28] sm:$0xf]
      %v692 = vld [vmem:[%s680 + $0x2c] sm:$0xf]
      %v693 = vld [vmem:[%s680 + $0x30] sm:$0xf]
      %v694 = vld [vmem:[%s680 + $0x34] sm:$0xf]
      %v695 = vld [vmem:[%s680 + $0x38] sm:$0xf]
      %v696 = vld [vmem:[%s680 + $0x3c] sm:$0xf]
      %v713 = vunpack.c.l.b16 %v681
      %v714 = vunpack.c.l.b16 %v682
      %v715 = vunpack.c.l.b16 %v683
      %v716 = vunpack.c.l.b16 %v684
      %v717 = vunpack.c.l.b16 %v685
      %v718 = vunpack.c.l.b16 %v686
      %v719 = vunpack.c.l.b16 %v687
      %v720 = vunpack.c.l.b16 %v688
      %v721 = vunpack.c.l.b16 %v689
      %v722 = vunpack.c.l.b16 %v690
      %v723 = vunpack.c.l.b16 %v691
      %v724 = vunpack.c.l.b16 %v692
      %v725 = vunpack.c.l.b16 %v693
      %v726 = vunpack.c.l.b16 %v694
      %v727 = vunpack.c.l.b16 %v695
      %v728 = vunpack.c.l.b16 %v696
      %v729 = vpack.c.b16 %v714, %v713
      %v730 = vpack.c.b16 %v716, %v715
      %v731 = vpack.c.b16 %v718, %v717
      %v732 = vpack.c.b16 %v720, %v719
      %v733 = vpack.c.b16 %v722, %v721
      %v734 = vpack.c.b16 %v724, %v723
      %v735 = vpack.c.b16 %v726, %v725
      %v736 = vpack.c.b16 %v728, %v727
      %745 = vmatprep.subr.bf16.mxu0 0
      %746 = vmatpush1.bf16.msra.mxu0 %v729
      %747 = vmatprep.subr.bf16.mxu0 0
      %748 = vmatpush1.bf16.msra.mxu0 %v730
      %749 = vmatprep.subr.bf16.mxu0 0
      %750 = vmatpush1.bf16.msra.mxu0 %v731
      %751 = vmatprep.subr.bf16.mxu0 0
      %752 = vmatpush1.bf16.msra.mxu0 %v732
      %753 = vmatprep.subr.bf16.mxu0 0
      %754 = vmatpush1.bf16.msra.mxu0 %v733
      %755 = vmatprep.subr.bf16.mxu0 0
      %756 = vmatpush1.bf16.msra.mxu0 %v734
      %757 = vmatprep.subr.bf16.mxu0 0
      %758 = vmatpush1.bf16.msra.mxu0 %v735
      %759 = vmatprep.subr.bf16.mxu0 0
      %760 = vmatpush1.bf16.msra.mxu0 %v736
      %761 = vmatprep.subr.bf16.mxu0 0
      %762 = vmatpush1.bf16.msra.mxu0 0
      %763 = vmatprep.subr.bf16.mxu0 0
      %764 = vmatpush1.bf16.msra.mxu0 0
      %765 = vmatprep.subr.bf16.mxu0 0
      %766 = vmatpush1.bf16.msra.mxu0 0
      %767 = vmatprep.subr.bf16.mxu0 0
      %768 = vmatpush1.bf16.msra.mxu0 0
      %769 = vmatprep.subr.bf16.mxu0 0
      %770 = vmatpush1.bf16.msra.mxu0 0
      %771 = vmatprep.subr.bf16.mxu0 0
      %772 = vmatpush1.bf16.msra.mxu0 0
      %773 = vmatprep.subr.bf16.mxu0 0
      %774 = vmatpush1.bf16.msra.mxu0 0
      %775 = vmatprep.subr.bf16.mxu0 0
      %776 = vmatpush1.bf16.msra.mxu0 0
      %777 = vmatprep.mubr.bf16.mxu0 0
      %778 = vmatmul.mubr.bf16.gmra.mrb[0].mxu0 %v672
      %v779 = vpop.f32.mrb[0].mxu0
      %v780 = vadd.f32 0.0, %v779
      %v781 = vpop.f32.mrb[0].mxu0
      %v782 = vpop.f32.mrb[0].mxu0
      %v783 = vadd.f32 0.0, %v782
      %v784 = vpop.f32.mrb[0].mxu0
      %785 = vmatprep.mubr.bf16.mxu0 0
      %786 = vmatmul.mubr.bf16.gmra.mrb[0].mxu0 %v673
      %v787 = vpop.f32.mrb[0].mxu0
      %v788 = vadd.f32 0.0, %v787
      %v789 = vpop.f32.mrb[0].mxu0
      %v790 = vpop.f32.mrb[0].mxu0
      %v791 = vadd.f32 0.0, %v790
      %v792 = vpop.f32.mrb[0].mxu0
      %793 = vmatprep.mubr.bf16.mxu0 0
      %794 = vmatmul.mubr.bf16.gmra.mrb[0].mxu0 %v674
      %v795 = vpop.f32.mrb[0].mxu0
      %v796 = vadd.f32 0.0, %v795
      %v797 = vpop.f32.mrb[0].mxu0
      %v798 = vpop.f32.mrb[0].mxu0
      %v799 = vadd.f32 0.0, %v798
      %v800 = vpop.f32.mrb[0].mxu0
      %801 = vmatprep.mubr.bf16.mxu0 0
      %802 = vmatmul.mubr.bf16.gmra.mrb[0].mxu0 %v675
      %v803 = vpop.f32.mrb[0].mxu0
      %v804 = vadd.f32 0.0, %v803
      %v805 = vpop.f32.mrb[0].mxu0
      %v806 = vpop.f32.mrb[0].mxu0
      %v807 = vadd.f32 0.0, %v806
      %v808 = vpop.f32.mrb[0].mxu0
      %809 = vmatprep.mubr.bf16.mxu0 0
      %810 = vmatmul.mubr.bf16.gmra.mrb[0].mxu0 %v676
      %v811 = vpop.f32.mrb[0].mxu0
      %v812 = vadd.f32 0.0, %v811
      %v813 = vpop.f32.mrb[0].mxu0
      %v814 = vpop.f32.mrb[0].mxu0
      %v815 = vadd.f32 0.0, %v814
      %v816 = vpop.f32.mrb[0].mxu0
      %817 = vmatprep.mubr.bf16.mxu0 0
      %818 = vmatmul.mubr.bf16.gmra.mrb[0].mxu0 %v677
      %v819 = vpop.f32.mrb[0].mxu0
      %v820 = vadd.f32 0.0, %v819
      %v821 = vpop.f32.mrb[0].mxu0
      %v822 = vpop.f32.mrb[0].mxu0
      %v823 = vadd.f32 0.0, %v822
      %v824 = vpop.f32.mrb[0].mxu0
      %825 = vmatprep.mubr.bf16.mxu0 0
      %826 = vmatmul.mubr.bf16.gmra.mrb[0].mxu0 %v678
      %v827 = vpop.f32.mrb[0].mxu0
      %v828 = vadd.f32 0.0, %v827
      %v829 = vpop.f32.mrb[0].mxu0
      %v830 = vpop.f32.mrb[0].mxu0
      %v831 = vadd.f32 0.0, %v830
      %v832 = vpop.f32.mrb[0].mxu0
      %833 = vmatprep.mubr.bf16.mxu0 0
      %834 = vmatmul.mubr.bf16.gmra.mrb[0].mxu0 %v679
      %v835 = vpop.f32.mrb[0].mxu0
      %v836 = vadd.f32 0.0, %v835
      %v837 = vpop.f32.mrb[0].mxu0
      %v838 = vpop.f32.mrb[0].mxu0
      %v839 = vadd.f32 0.0, %v838
      %v840 = vpop.f32.mrb[0].mxu0
      %841 = vdwg.mxu0
      %v858 = vunpack.c.l.b16 %v656
      %v859 = vunpack.c.l.b16 %v657
      %v860 = vunpack.c.l.b16 %v658
      %v861 = vunpack.c.l.b16 %v659
      %v862 = vunpack.c.l.b16 %v660
      %v863 = vunpack.c.l.b16 %v661
      %v864 = vunpack.c.l.b16 %v662
      %v865 = vunpack.c.l.b16 %v663
      %v866 = vunpack.c.l.b16 %v664
      %v867 = vunpack.c.l.b16 %v665
      %v868 = vunpack.c.l.b16 %v666
      %v869 = vunpack.c.l.b16 %v667
      %v870 = vunpack.c.l.b16 %v668
      %v871 = vunpack.c.l.b16 %v669
      %v872 = vunpack.c.l.b16 %v670
      %v873 = vunpack.c.l.b16 %v671
      %v874 = vpack.c.b16 %v859, %v858
      %v875 = vpack.c.b16 %v861, %v860
      %v876 = vpack.c.b16 %v863, %v862
      %v877 = vpack.c.b16 %v865, %v864
      %v878 = vpack.c.b16 %v867, %v866
      %v879 = vpack.c.b16 %v869, %v868
      %v880 = vpack.c.b16 %v871, %v870
      %v881 = vpack.c.b16 %v873, %v872
      %890 = vmatprep.subr.bf16.mxu0 0
      %891 = vmatpush1.bf16.msra.mxu0 %v874
      %892 = vmatprep.subr.bf16.mxu0 0
      %893 = vmatpush1.bf16.msra.mxu0 %v875
      %894 = vmatprep.subr.bf16.mxu0 0
      %895 = vmatpush1.bf16.msra.mxu0 %v876
      %896 = vmatprep.subr.bf16.mxu0 0
      %897 = vmatpush1.bf16.msra.mxu0 %v877
      %898 = vmatprep.subr.bf16.mxu0 0
      %899 = vmatpush1.bf16.msra.mxu0 %v878
      %900 = vmatprep.subr.bf16.mxu0 0
      %901 = vmatpush1.bf16.msra.mxu0 %v879
      %902 = vmatprep.subr.bf16.mxu0 0
      %903 = vmatpush1.bf16.msra.mxu0 %v880
      %904 = vmatprep.subr.bf16.mxu0 0
      %905 = vmatpush1.bf16.msra.mxu0 %v881
      %906 = vmatprep.subr.bf16.mxu0 0
      %907 = vmatpush1.bf16.msra.mxu0 0
      %908 = vmatprep.subr.bf16.mxu0 0
      %909 = vmatpush1.bf16.msra.mxu0 0
      %910 = vmatprep.subr.bf16.mxu0 0
      %911 = vmatpush1.bf16.msra.mxu0 0
      %912 = vmatprep.subr.bf16.mxu0 0
      %913 = vmatpush1.bf16.msra.mxu0 0
      %914 = vmatprep.subr.bf16.mxu0 0
      %915 = vmatpush1.bf16.msra.mxu0 0
      %916 = vmatprep.subr.bf16.mxu0 0
      %917 = vmatpush1.bf16.msra.mxu0 0
      %918 = vmatprep.subr.bf16.mxu0 0
      %919 = vmatpush1.bf16.msra.mxu0 0
      %920 = vmatprep.subr.bf16.mxu0 0
      %921 = vmatpush1.bf16.msra.mxu0 0
      %922 = vmatprep.mubr.bf16.mxu0 0
      %923 = vmatmul.mubr.bf16.gmra.mrb[0].mxu0 %v648
      %v924 = vpop.f32.mrb[0].mxu0
      %v925 = vadd.f32 %v780, %v924
      %v926 = vpop.f32.mrb[0].mxu0
      %v927 = vpop.f32.mrb[0].mxu0
      %v928 = vadd.f32 %v783, %v927
      %v929 = vpop.f32.mrb[0].mxu0
      %930 = vmatprep.mubr.bf16.mxu0 0
      %931 = vmatmul.mubr.bf16.gmra.mrb[0].mxu0 %v649
      %v932 = vpop.f32.mrb[0].mxu0
      %v933 = vadd.f32 %v788, %v932
      %v934 = vpop.f32.mrb[0].mxu0
      %v935 = vpop.f32.mrb[0].mxu0
      %v936 = vadd.f32 %v791, %v935
      %v937 = vpop.f32.mrb[0].mxu0
      %938 = vmatprep.mubr.bf16.mxu0 0
      %939 = vmatmul.mubr.bf16.gmra.mrb[0].mxu0 %v650
      %v940 = vpop.f32.mrb[0].mxu0
      %v941 = vadd.f32 %v796, %v940
      %v942 = vpop.f32.mrb[0].mxu0
      %v943 = vpop.f32.mrb[0].mxu0
      %v944 = vadd.f32 %v799, %v943
      %v945 = vpop.f32.mrb[0].mxu0
      %946 = vmatprep.mubr.bf16.mxu0 0
      %947 = vmatmul.mubr.bf16.gmra.mrb[0].mxu0 %v651
      %v948 = vpop.f32.mrb[0].mxu0
      %v949 = vadd.f32 %v804, %v948
      %v950 = vpop.f32.mrb[0].mxu0
      %v951 = vpop.f32.mrb[0].mxu0
      %v952 = vadd.f32 %v807, %v951
      %v953 = vpop.f32.mrb[0].mxu0
      %954 = vmatprep.mubr.bf16.mxu0 0
      %955 = vmatmul.mubr.bf16.gmra.mrb[0].mxu0 %v652
      %v956 = vpop.f32.mrb[0].mxu0
      %v957 = vadd.f32 %v812, %v956
      %v958 = vpop.f32.mrb[0].mxu0
      %v959 = vpop.f32.mrb[0].mxu0
      %v960 = vadd.f32 %v815, %v959
      %v961 = vpop.f32.mrb[0].mxu0
      %962 = vmatprep.mubr.bf16.mxu0 0
      %963 = vmatmul.mubr.bf16.gmra.mrb[0].mxu0 %v653
      %v964 = vpop.f32.mrb[0].mxu0
      %v965 = vadd.f32 %v820, %v964
      %v966 = vpop.f32.mrb[0].mxu0
      %v967 = vpop.f32.mrb[0].mxu0
      %v968 = vadd.f32 %v823, %v967
      %v969 = vpop.f32.mrb[0].mxu0
      %970 = vmatprep.mubr.bf16.mxu0 0
      %971 = vmatmul.mubr.bf16.gmra.mrb[0].mxu0 %v654
      %v972 = vpop.f32.mrb[0].mxu0
      %v973 = vadd.f32 %v828, %v972
      %v974 = vpop.f32.mrb[0].mxu0
      %v975 = vpop.f32.mrb[0].mxu0
      %v976 = vadd.f32 %v831, %v975
      %v977 = vpop.f32.mrb[0].mxu0
      %978 = vmatprep.mubr.bf16.mxu0 0
      %979 = vmatmul.mubr.bf16.gmra.mrb[0].mxu0 %v655
      %v980 = vpop.f32.mrb[0].mxu0
      %v981 = vadd.f32 %v836, %v980
      %v982 = vpop.f32.mrb[0].mxu0
      %v983 = vpop.f32.mrb[0].mxu0
      %v984 = vadd.f32 %v839, %v983
      %v985 = vpop.f32.mrb[0].mxu0
      %986 = vdwg.mxu0
      %v987 = vpack.c.bf16 %v633, %v632
      %v988 = vpack.c.bf16 %v635, %v634
      %v989 = vpack.c.bf16 %v637, %v636
      %v990 = vpack.c.bf16 %v639, %v638
      %v991 = vpack.c.bf16 %v641, %v640
      %v992 = vpack.c.bf16 %v643, %v642
      %v993 = vpack.c.bf16 %v645, %v644
      %v994 = vpack.c.bf16 %v647, %v646
      %s995 = scalar_lea.vmem %s1, 128
      %v996 = vld [vmem:[%s995] sm:$0xf]
      %v997 = vld [vmem:[%s995 + $0x4] sm:$0xf]
      %v998 = vld [vmem:[%s995 + $0x8] sm:$0xf]
      %v999 = vld [vmem:[%s995 + $0xc] sm:$0xf]
      %v1000 = vld [vmem:[%s995 + $0x10] sm:$0xf]
      %v1001 = vld [vmem:[%s995 + $0x14] sm:$0xf]
      %v1002 = vld [vmem:[%s995 + $0x18] sm:$0xf]
      %v1003 = vld [vmem:[%s995 + $0x1c] sm:$0xf]
      %v1004 = vld [vmem:[%s995 + $0x20] sm:$0xf]
      %v1005 = vld [vmem:[%s995 + $0x24] sm:$0xf]
      %v1006 = vld [vmem:[%s995 + $0x28] sm:$0xf]
      %v1007 = vld [vmem:[%s995 + $0x2c] sm:$0xf]
      %v1008 = vld [vmem:[%s995 + $0x30] sm:$0xf]
      %v1009 = vld [vmem:[%s995 + $0x34] sm:$0xf]
      %v1010 = vld [vmem:[%s995 + $0x38] sm:$0xf]
      %v1011 = vld [vmem:[%s995 + $0x3c] sm:$0xf]
      %v1028 = vunpack.c.l.b16 %v996
      %v1029 = vunpack.c.l.b16 %v997
      %v1030 = vunpack.c.l.b16 %v998
      %v1031 = vunpack.c.l.b16 %v999
      %v1032 = vunpack.c.l.b16 %v1000
      %v1033 = vunpack.c.l.b16 %v1001
      %v1034 = vunpack.c.l.b16 %v1002
      %v1035 = vunpack.c.l.b16 %v1003
      %v1036 = vunpack.c.l.b16 %v1004
      %v1037 = vunpack.c.l.b16 %v1005
      %v1038 = vunpack.c.l.b16 %v1006
      %v1039 = vunpack.c.l.b16 %v1007
      %v1040 = vunpack.c.l.b16 %v1008
      %v1041 = vunpack.c.l.b16 %v1009
      %v1042 = vunpack.c.l.b16 %v1010
      %v1043 = vunpack.c.l.b16 %v1011
      %v1044 = vpack.c.b16 %v1029, %v1028
      %v1045 = vpack.c.b16 %v1031, %v1030
      %v1046 = vpack.c.b16 %v1033, %v1032
      %v1047 = vpack.c.b16 %v1035, %v1034
      %v1048 = vpack.c.b16 %v1037, %v1036
      %v1049 = vpack.c.b16 %v1039, %v1038
      %v1050 = vpack.c.b16 %v1041, %v1040
      %v1051 = vpack.c.b16 %v1043, %v1042
      %1060 = vmatprep.subr.bf16.mxu0 0
      %1061 = vmatpush1.bf16.msra.mxu0 %v1044
      %1062 = vmatprep.subr.bf16.mxu0 0
      %1063 = vmatpush1.bf16.msra.mxu0 %v1045
      %1064 = vmatprep.subr.bf16.mxu0 0
      %1065 = vmatpush1.bf16.msra.mxu0 %v1046
      %1066 = vmatprep.subr.bf16.mxu0 0
      %1067 = vmatpush1.bf16.msra.mxu0 %v1047
      %1068 = vmatprep.subr.bf16.mxu0 0
      %1069 = vmatpush1.bf16.msra.mxu0 %v1048
      %1070 = vmatprep.subr.bf16.mxu0 0
      %1071 = vmatpush1.bf16.msra.mxu0 %v1049
      %1072 = vmatprep.subr.bf16.mxu0 0
      %1073 = vmatpush1.bf16.msra.mxu0 %v1050
      %1074 = vmatprep.subr.bf16.mxu0 0
      %1075 = vmatpush1.bf16.msra.mxu0 %v1051
      %1076 = vmatprep.subr.bf16.mxu0 0
      %1077 = vmatpush1.bf16.msra.mxu0 0
      %1078 = vmatprep.subr.bf16.mxu0 0
      %1079 = vmatpush1.bf16.msra.mxu0 0
      %1080 = vmatprep.subr.bf16.mxu0 0
      %1081 = vmatpush1.bf16.msra.mxu0 0
      %1082 = vmatprep.subr.bf16.mxu0 0
      %1083 = vmatpush1.bf16.msra.mxu0 0
      %1084 = vmatprep.subr.bf16.mxu0 0
      %1085 = vmatpush1.bf16.msra.mxu0 0
      %1086 = vmatprep.subr.bf16.mxu0 0
      %1087 = vmatpush1.bf16.msra.mxu0 0
      %1088 = vmatprep.subr.bf16.mxu0 0
      %1089 = vmatpush1.bf16.msra.mxu0 0
      %1090 = vmatprep.subr.bf16.mxu0 0
      %1091 = vmatpush1.bf16.msra.mxu0 0
      %1092 = vmatprep.mubr.bf16.mxu0 0
      %1093 = vmatmul.mubr.bf16.gmra.mrb[0].mxu0 %v987
      %v1094 = vpop.f32.mrb[0].mxu0
      %v1095 = vadd.f32 0.0, %v1094
      %v1096 = vpop.f32.mrb[0].mxu0
      %v1097 = vpop.f32.mrb[0].mxu0
      %v1098 = vadd.f32 0.0, %v1097
      %v1099 = vpop.f32.mrb[0].mxu0
      %1100 = vmatprep.mubr.bf16.mxu0 0
      %1101 = vmatmul.mubr.bf16.gmra.mrb[0].mxu0 %v988
      %v1102 = vpop.f32.mrb[0].mxu0
      %v1103 = vadd.f32 0.0, %v1102
      %v1104 = vpop.f32.mrb[0].mxu0
      %v1105 = vpop.f32.mrb[0].mxu0
      %v1106 = vadd.f32 0.0, %v1105
      %v1107 = vpop.f32.mrb[0].mxu0
      %1108 = vmatprep.mubr.bf16.mxu0 0
      %1109 = vmatmul.mubr.bf16.gmra.mrb[0].mxu0 %v989
      %v1110 = vpop.f32.mrb[0].mxu0
      %v1111 = vadd.f32 0.0, %v1110
      %v1112 = vpop.f32.mrb[0].mxu0
      %v1113 = vpop.f32.mrb[0].mxu0
      %v1114 = vadd.f32 0.0, %v1113
      %v1115 = vpop.f32.mrb[0].mxu0
      %1116 = vmatprep.mubr.bf16.mxu0 0
      %1117 = vmatmul.mubr.bf16.gmra.mrb[0].mxu0 %v990
      %v1118 = vpop.f32.mrb[0].mxu0
      %v1119 = vadd.f32 0.0, %v1118
      %v1120 = vpop.f32.mrb[0].mxu0
      %v1121 = vpop.f32.mrb[0].mxu0
      %v1122 = vadd.f32 0.0, %v1121
      %v1123 = vpop.f32.mrb[0].mxu0
      %1124 = vmatprep.mubr.bf16.mxu0 0
      %1125 = vmatmul.mubr.bf16.gmra.mrb[0].mxu0 %v991
      %v1126 = vpop.f32.mrb[0].mxu0
      %v1127 = vadd.f32 0.0, %v1126
      %v1128 = vpop.f32.mrb[0].mxu0
      %v1129 = vpop.f32.mrb[0].mxu0
      %v1130 = vadd.f32 0.0, %v1129
      %v1131 = vpop.f32.mrb[0].mxu0
      %1132 = vmatprep.mubr.bf16.mxu0 0
      %1133 = vmatmul.mubr.bf16.gmra.mrb[0].mxu0 %v992
      %v1134 = vpop.f32.mrb[0].mxu0
      %v1135 = vadd.f32 0.0, %v1134
      %v1136 = vpop.f32.mrb[0].mxu0
      %v1137 = vpop.f32.mrb[0].mxu0
      %v1138 = vadd.f32 0.0, %v1137
      %v1139 = vpop.f32.mrb[0].mxu0
      %1140 = vmatprep.mubr.bf16.mxu0 0
      %1141 = vmatmul.mubr.bf16.gmra.mrb[0].mxu0 %v993
      %v1142 = vpop.f32.mrb[0].mxu0
      %v1143 = vadd.f32 0.0, %v1142
      %v1144 = vpop.f32.mrb[0].mxu0
      %v1145 = vpop.f32.mrb[0].mxu0
      %v1146 = vadd.f32 0.0, %v1145
      %v1147 = vpop.f32.mrb[0].mxu0
      %1148 = vmatprep.mubr.bf16.mxu0 0
      %1149 = vmatmul.mubr.bf16.gmra.mrb[0].mxu0 %v994
      %v1150 = vpop.f32.mrb[0].mxu0
      %v1151 = vadd.f32 0.0, %v1150
      %v1152 = vpop.f32.mrb[0].mxu0
      %v1153 = vpop.f32.mrb[0].mxu0
      %v1154 = vadd.f32 0.0, %v1153
      %v1155 = vpop.f32.mrb[0].mxu0
      %1156 = vdwg.mxu0
      %v1157 = vadd.f32 %v925, %v1095
      %v1158 = vadd.f32 %v928, %v1098
      %v1159 = vadd.f32 %v933, %v1103
      %v1160 = vadd.f32 %v936, %v1106
      %v1161 = vadd.f32 %v941, %v1111
      %v1162 = vadd.f32 %v944, %v1114
      %v1163 = vadd.f32 %v949, %v1119
      %v1164 = vadd.f32 %v952, %v1122
      %v1165 = vadd.f32 %v957, %v1127
      %v1166 = vadd.f32 %v960, %v1130
      %v1167 = vadd.f32 %v965, %v1135
      %v1168 = vadd.f32 %v968, %v1138
      %v1169 = vadd.f32 %v973, %v1143
      %v1170 = vadd.f32 %v976, %v1146
      %v1171 = vadd.f32 %v981, %v1151
      %v1172 = vadd.f32 %v984, %v1154
      %v1173 = vld [vmem:[%s2] sm:$0x1]
      %v1175 = vlaneseq
      %v1176 = vshrl.u32 %v1175, 7
      %v1177 = vsub.s32 0, %v1176
      %v1178 = vrot.slane %v1173, %v1177
      %v1180 = vadd.f32 %v1157, %v1178
      %v1181 = vadd.f32 %v1158, %v1178
      %v1182 = vadd.f32 %v1159, %v1178
      %v1183 = vadd.f32 %v1160, %v1178
      %v1184 = vadd.f32 %v1161, %v1178
      %v1185 = vadd.f32 %v1162, %v1178
      %v1186 = vadd.f32 %v1163, %v1178
      %v1187 = vadd.f32 %v1164, %v1178
      %v1188 = vadd.f32 %v1165, %v1178
      %v1189 = vadd.f32 %v1166, %v1178
      %v1190 = vadd.f32 %v1167, %v1178
      %v1191 = vadd.f32 %v1168, %v1178
      %v1192 = vadd.f32 %v1169, %v1178
      %v1193 = vadd.f32 %v1170, %v1178
      %v1194 = vadd.f32 %v1171, %v1178
      %v1195 = vadd.f32 %v1172, %v1178
      %vm1196 = vcmp.gt.f32.partialorder %v1180, 0.0
      %vm1197 = vcmp.gt.f32.partialorder %v1181, 0.0
      %vm1198 = vcmp.gt.f32.partialorder %v1182, 0.0
      %vm1199 = vcmp.gt.f32.partialorder %v1183, 0.0
      %vm1200 = vcmp.gt.f32.partialorder %v1184, 0.0
      %vm1201 = vcmp.gt.f32.partialorder %v1185, 0.0
      %vm1202 = vcmp.gt.f32.partialorder %v1186, 0.0
      %vm1203 = vcmp.gt.f32.partialorder %v1187, 0.0
      %vm1204 = vcmp.gt.f32.partialorder %v1188, 0.0
      %vm1205 = vcmp.gt.f32.partialorder %v1189, 0.0
      %vm1206 = vcmp.gt.f32.partialorder %v1190, 0.0
      %vm1207 = vcmp.gt.f32.partialorder %v1191, 0.0
      %vm1208 = vcmp.gt.f32.partialorder %v1192, 0.0
      %vm1209 = vcmp.gt.f32.partialorder %v1193, 0.0
      %vm1210 = vcmp.gt.f32.partialorder %v1194, 0.0
      %vm1211 = vcmp.gt.f32.partialorder %v1195, 0.0
      %v1212 = vmul.f32 %v1180, 0.01
      %v1213 = vmul.f32 %v1181, 0.01
      %v1214 = vmul.f32 %v1182, 0.01
      %v1215 = vmul.f32 %v1183, 0.01
      %v1216 = vmul.f32 %v1184, 0.01
      %v1217 = vmul.f32 %v1185, 0.01
      %v1218 = vmul.f32 %v1186, 0.01
      %v1219 = vmul.f32 %v1187, 0.01
      %v1220 = vmul.f32 %v1188, 0.01
      %v1221 = vmul.f32 %v1189, 0.01
      %v1222 = vmul.f32 %v1190, 0.01
      %v1223 = vmul.f32 %v1191, 0.01
      %v1224 = vmul.f32 %v1192, 0.01
      %v1225 = vmul.f32 %v1193, 0.01
      %v1226 = vmul.f32 %v1194, 0.01
      %v1227 = vmul.f32 %v1195, 0.01
      %v1228 = vsel %vm1196, %v1180, %v1212
      %v1229 = vsel %vm1197, %v1181, %v1213
      %v1230 = vsel %vm1198, %v1182, %v1214
      %v1231 = vsel %vm1199, %v1183, %v1215
      %v1232 = vsel %vm1200, %v1184, %v1216
      %v1233 = vsel %vm1201, %v1185, %v1217
      %v1234 = vsel %vm1202, %v1186, %v1218
      %v1235 = vsel %vm1203, %v1187, %v1219
      %v1236 = vsel %vm1204, %v1188, %v1220
      %v1237 = vsel %vm1205, %v1189, %v1221
      %v1238 = vsel %vm1206, %v1190, %v1222
      %v1239 = vsel %vm1207, %v1191, %v1223
      %v1240 = vsel %vm1208, %v1192, %v1224
      %v1241 = vsel %vm1209, %v1193, %v1225
      %v1242 = vsel %vm1210, %v1194, %v1226
      %v1243 = vsel %vm1211, %v1195, %v1227
      %v1244 = vrot.slane %v1228, 7
      %v1245 = vrot.slane %v1229, 7
      %v1246 = vrot.slane %v1230, 7
      %v1247 = vrot.slane %v1231, 7
      %v1248 = vrot.slane %v1232, 7
      %v1249 = vrot.slane %v1233, 7
      %v1250 = vrot.slane %v1234, 7
      %v1251 = vrot.slane %v1235, 7
      %v1252 = vrot.slane %v1236, 7
      %v1253 = vrot.slane %v1237, 7
      %v1254 = vrot.slane %v1238, 7
      %v1255 = vrot.slane %v1239, 7
      %v1256 = vrot.slane %v1240, 7
      %v1257 = vrot.slane %v1241, 7
      %v1258 = vrot.slane %v1242, 7
      %v1259 = vrot.slane %v1243, 7
      %v1260 = vsel %vm502, %v1258, %v1259
      %v1261 = vsel %vm502, %v1257, %v1258
      %v1262 = vsel %vm502, %v1256, %v1257
      %v1263 = vsel %vm502, %v1255, %v1256
      %v1264 = vsel %vm502, %v1254, %v1255
      %v1265 = vsel %vm502, %v1253, %v1254
      %v1266 = vsel %vm502, %v1252, %v1253
      %v1267 = vsel %vm502, %v1251, %v1252
      %v1268 = vsel %vm502, %v1250, %v1251
      %v1269 = vsel %vm502, %v1249, %v1250
      %v1270 = vsel %vm502, %v1248, %v1249
      %v1271 = vsel %vm502, %v1247, %v1248
      %v1272 = vsel %vm502, %v1246, %v1247
      %v1273 = vsel %vm502, %v1245, %v1246
      %v1274 = vsel %vm502, %v1244, %v1245
      %v1275 = vsel %vm502, %v1259, %v1244
      %v1276 = vsel %vm535, %v1275, 0.0
      %v1277 = vsel %vm536, %v1274, 0.0
      %v1278 = vsel %vm537, %v1273, 0.0
      %v1279 = vsel %vm538, %v1272, 0.0
      %v1280 = vsel %vm539, %v1271, 0.0
      %v1281 = vsel %vm540, %v1270, 0.0
      %v1282 = vsel %vm541, %v1269, 0.0
      %v1283 = vsel %vm542, %v1268, 0.0
      %v1284 = vsel %vm543, %v1267, 0.0
      %v1285 = vsel %vm544, %v1266, 0.0
      %v1286 = vsel %vm545, %v1265, 0.0
      %v1287 = vsel %vm546, %v1264, 0.0
      %v1288 = vsel %vm547, %v1263, 0.0
      %v1289 = vsel %vm548, %v1262, 0.0
      %v1290 = vsel %vm549, %v1261, 0.0
      %v1291 = vsel %vm550, %v1260, 0.0
      %v1292 = vrot.slane %v1228, 1
      %v1293 = vrot.slane %v1229, 1
      %v1294 = vrot.slane %v1230, 1
      %v1295 = vrot.slane %v1231, 1
      %v1296 = vrot.slane %v1232, 1
      %v1297 = vrot.slane %v1233, 1
      %v1298 = vrot.slane %v1234, 1
      %v1299 = vrot.slane %v1235, 1
      %v1300 = vrot.slane %v1236, 1
      %v1301 = vrot.slane %v1237, 1
      %v1302 = vrot.slane %v1238, 1
      %v1303 = vrot.slane %v1239, 1
      %v1304 = vrot.slane %v1240, 1
      %v1305 = vrot.slane %v1241, 1
      %v1306 = vrot.slane %v1242, 1
      %v1307 = vrot.slane %v1243, 1
      %v1308 = vsel %vm583, %v1306, %v1307
      %v1309 = vsel %vm583, %v1305, %v1306
      %v1310 = vsel %vm583, %v1304, %v1305
      %v1311 = vsel %vm583, %v1303, %v1304
      %v1312 = vsel %vm583, %v1302, %v1303
      %v1313 = vsel %vm583, %v1301, %v1302
      %v1314 = vsel %vm583, %v1300, %v1301
      %v1315 = vsel %vm583, %v1299, %v1300
      %v1316 = vsel %vm583, %v1298, %v1299
      %v1317 = vsel %vm583, %v1297, %v1298
      %v1318 = vsel %vm583, %v1296, %v1297
      %v1319 = vsel %vm583, %v1295, %v1296
      %v1320 = vsel %vm583, %v1294, %v1295
      %v1321 = vsel %vm583, %v1293, %v1294
      %v1322 = vsel %vm583, %v1292, %v1293
      %v1323 = vsel %vm583, %v1307, %v1292
      %v1324 = vsel %vm616, %v1322, 0.0
      %v1325 = vsel %vm617, %v1321, 0.0
      %v1326 = vsel %vm618, %v1320, 0.0
      %v1327 = vsel %vm619, %v1319, 0.0
      %v1328 = vsel %vm620, %v1318, 0.0
      %v1329 = vsel %vm621, %v1317, 0.0
      %v1330 = vsel %vm622, %v1316, 0.0
      %v1331 = vsel %vm623, %v1315, 0.0
      %v1332 = vsel %vm624, %v1314, 0.0
      %v1333 = vsel %vm625, %v1313, 0.0
      %v1334 = vsel %vm626, %v1312, 0.0
      %v1335 = vsel %vm627, %v1311, 0.0
      %v1336 = vsel %vm628, %v1310, 0.0
      %v1337 = vsel %vm629, %v1309, 0.0
      %v1338 = vsel %vm630, %v1308, 0.0
      %v1339 = vsel %vm631, %v1323, 0.0
      %v1340 = vpack.c.bf16 %v1277, %v1276
      %v1341 = vpack.c.bf16 %v1279, %v1278
      %v1342 = vpack.c.bf16 %v1281, %v1280
      %v1343 = vpack.c.bf16 %v1283, %v1282
      %v1344 = vpack.c.bf16 %v1285, %v1284
      %v1345 = vpack.c.bf16 %v1287, %v1286
      %v1346 = vpack.c.bf16 %v1289, %v1288
      %v1347 = vpack.c.bf16 %v1291, %v1290
      %v1348 = vld [vmem:[%s3] sm:$0xf]
      %v1349 = vld [vmem:[%s3 + $0x4] sm:$0xf]
      %v1350 = vld [vmem:[%s3 + $0x8] sm:$0xf]
      %v1351 = vld [vmem:[%s3 + $0xc] sm:$0xf]
      %v1352 = vld [vmem:[%s3 + $0x10] sm:$0xf]
      %v1353 = vld [vmem:[%s3 + $0x14] sm:$0xf]
      %v1354 = vld [vmem:[%s3 + $0x18] sm:$0xf]
      %v1355 = vld [vmem:[%s3 + $0x1c] sm:$0xf]
      %v1356 = vld [vmem:[%s3 + $0x20] sm:$0xf]
      %v1357 = vld [vmem:[%s3 + $0x24] sm:$0xf]
      %v1358 = vld [vmem:[%s3 + $0x28] sm:$0xf]
      %v1359 = vld [vmem:[%s3 + $0x2c] sm:$0xf]
      %v1360 = vld [vmem:[%s3 + $0x30] sm:$0xf]
      %v1361 = vld [vmem:[%s3 + $0x34] sm:$0xf]
      %v1362 = vld [vmem:[%s3 + $0x38] sm:$0xf]
      %v1363 = vld [vmem:[%s3 + $0x3c] sm:$0xf]
      %v1364 = vpack.c.bf16 %v1229, %v1228
      %v1365 = vpack.c.bf16 %v1231, %v1230
      %v1366 = vpack.c.bf16 %v1233, %v1232
      %v1367 = vpack.c.bf16 %v1235, %v1234
      %v1368 = vpack.c.bf16 %v1237, %v1236
      %v1369 = vpack.c.bf16 %v1239, %v1238
      %v1370 = vpack.c.bf16 %v1241, %v1240
      %v1371 = vpack.c.bf16 %v1243, %v1242
      %s1372 = scalar_lea.vmem %s3, 64
      %v1373 = vld [vmem:[%s1372] sm:$0xf]
      %v1374 = vld [vmem:[%s1372 + $0x4] sm:$0xf]
      %v1375 = vld [vmem:[%s1372 + $0x8] sm:$0xf]
      %v1376 = vld [vmem:[%s1372 + $0xc] sm:$0xf]
      %v1377 = vld [vmem:[%s1372 + $0x10] sm:$0xf]
      %v1378 = vld [vmem:[%s1372 + $0x14] sm:$0xf]
      %v1379 = vld [vmem:[%s1372 + $0x18] sm:$0xf]
      %v1380 = vld [vmem:[%s1372 + $0x1c] sm:$0xf]
      %v1381 = vld [vmem:[%s1372 + $0x20] sm:$0xf]
      %v1382 = vld [vmem:[%s1372 + $0x24] sm:$0xf]
      %v1383 = vld [vmem:[%s1372 + $0x28] sm:$0xf]
      %v1384 = vld [vmem:[%s1372 + $0x2c] sm:$0xf]
      %v1385 = vld [vmem:[%s1372 + $0x30] sm:$0xf]
      %v1386 = vld [vmem:[%s1372 + $0x34] sm:$0xf]
      %v1387 = vld [vmem:[%s1372 + $0x38] sm:$0xf]
      %v1388 = vld [vmem:[%s1372 + $0x3c] sm:$0xf]
      %v1405 = vunpack.c.l.b16 %v1373
      %v1406 = vunpack.c.l.b16 %v1374
      %v1407 = vunpack.c.l.b16 %v1375
      %v1408 = vunpack.c.l.b16 %v1376
      %v1409 = vunpack.c.l.b16 %v1377
      %v1410 = vunpack.c.l.b16 %v1378
      %v1411 = vunpack.c.l.b16 %v1379
      %v1412 = vunpack.c.l.b16 %v1380
      %v1413 = vunpack.c.l.b16 %v1381
      %v1414 = vunpack.c.l.b16 %v1382
      %v1415 = vunpack.c.l.b16 %v1383
      %v1416 = vunpack.c.l.b16 %v1384
      %v1417 = vunpack.c.l.b16 %v1385
      %v1418 = vunpack.c.l.b16 %v1386
      %v1419 = vunpack.c.l.b16 %v1387
      %v1420 = vunpack.c.l.b16 %v1388
      %v1421 = vpack.c.b16 %v1406, %v1405
      %v1422 = vpack.c.b16 %v1408, %v1407
      %v1423 = vpack.c.b16 %v1410, %v1409
      %v1424 = vpack.c.b16 %v1412, %v1411
      %v1425 = vpack.c.b16 %v1414, %v1413
      %v1426 = vpack.c.b16 %v1416, %v1415
      %v1427 = vpack.c.b16 %v1418, %v1417
      %v1428 = vpack.c.b16 %v1420, %v1419
      %1437 = vmatprep.subr.bf16.mxu0 0
      %1438 = vmatpush1.bf16.msra.mxu0 %v1421
      %1439 = vmatprep.subr.bf16.mxu0 0
      %1440 = vmatpush1.bf16.msra.mxu0 %v1422
      %1441 = vmatprep.subr.bf16.mxu0 0
      %1442 = vmatpush1.bf16.msra.mxu0 %v1423
      %1443 = vmatprep.subr.bf16.mxu0 0
      %1444 = vmatpush1.bf16.msra.mxu0 %v1424
      %1445 = vmatprep.subr.bf16.mxu0 0
      %1446 = vmatpush1.bf16.msra.mxu0 %v1425
      %1447 = vmatprep.subr.bf16.mxu0 0
      %1448 = vmatpush1.bf16.msra.mxu0 %v1426
      %1449 = vmatprep.subr.bf16.mxu0 0
      %1450 = vmatpush1.bf16.msra.mxu0 %v1427
      %1451 = vmatprep.subr.bf16.mxu0 0
      %1452 = vmatpush1.bf16.msra.mxu0 %v1428
      %1453 = vmatprep.subr.bf16.mxu0 0
      %1454 = vmatpush1.bf16.msra.mxu0 0
      %1455 = vmatprep.subr.bf16.mxu0 0
      %1456 = vmatpush1.bf16.msra.mxu0 0
      %1457 = vmatprep.subr.bf16.mxu0 0
      %1458 = vmatpush1.bf16.msra.mxu0 0
      %1459 = vmatprep.subr.bf16.mxu0 0
      %1460 = vmatpush1.bf16.msra.mxu0 0
      %1461 = vmatprep.subr.bf16.mxu0 0
      %1462 = vmatpush1.bf16.msra.mxu0 0
      %1463 = vmatprep.subr.bf16.mxu0 0
      %1464 = vmatpush1.bf16.msra.mxu0 0
      %1465 = vmatprep.subr.bf16.mxu0 0
      %1466 = vmatpush1.bf16.msra.mxu0 0
      %1467 = vmatprep.subr.bf16.mxu0 0
      %1468 = vmatpush1.bf16.msra.mxu0 0
      %1469 = vmatprep.mubr.bf16.mxu0 0
      %1470 = vmatmul.mubr.bf16.gmra.mrb[0].mxu0 %v1364
      %v1471 = vpop.f32.mrb[0].mxu0
      %v1472 = vadd.f32 0.0, %v1471
      %v1473 = vpop.f32.mrb[0].mxu0
      %v1474 = vpop.f32.mrb[0].mxu0
      %v1475 = vadd.f32 0.0, %v1474
      %v1476 = vpop.f32.mrb[0].mxu0
      %1477 = vmatprep.mubr.bf16.mxu0 0
      %1478 = vmatmul.mubr.bf16.gmra.mrb[0].mxu0 %v1365
      %v1479 = vpop.f32.mrb[0].mxu0
      %v1480 = vadd.f32 0.0, %v1479
      %v1481 = vpop.f32.mrb[0].mxu0
      %v1482 = vpop.f32.mrb[0].mxu0
      %v1483 = vadd.f32 0.0, %v1482
      %v1484 = vpop.f32.mrb[0].mxu0
      %1485 = vmatprep.mubr.bf16.mxu0 0
      %1486 = vmatmul.mubr.bf16.gmra.mrb[0].mxu0 %v1366
      %v1487 = vpop.f32.mrb[0].mxu0
      %v1488 = vadd.f32 0.0, %v1487
      %v1489 = vpop.f32.mrb[0].mxu0
      %v1490 = vpop.f32.mrb[0].mxu0
      %v1491 = vadd.f32 0.0, %v1490
      %v1492 = vpop.f32.mrb[0].mxu0
      %1493 = vmatprep.mubr.bf16.mxu0 0
      %1494 = vmatmul.mubr.bf16.gmra.mrb[0].mxu0 %v1367
      %v1495 = vpop.f32.mrb[0].mxu0
      %v1496 = vadd.f32 0.0, %v1495
      %v1497 = vpop.f32.mrb[0].mxu0
      %v1498 = vpop.f32.mrb[0].mxu0
      %v1499 = vadd.f32 0.0, %v1498
      %v1500 = vpop.f32.mrb[0].mxu0
      %1501 = vmatprep.mubr.bf16.mxu0 0
      %1502 = vmatmul.mubr.bf16.gmra.mrb[0].mxu0 %v1368
      %v1503 = vpop.f32.mrb[0].mxu0
      %v1504 = vadd.f32 0.0, %v1503
      %v1505 = vpop.f32.mrb[0].mxu0
      %v1506 = vpop.f32.mrb[0].mxu0
      %v1507 = vadd.f32 0.0, %v1506
      %v1508 = vpop.f32.mrb[0].mxu0
      %1509 = vmatprep.mubr.bf16.mxu0 0
      %1510 = vmatmul.mubr.bf16.gmra.mrb[0].mxu0 %v1369
      %v1511 = vpop.f32.mrb[0].mxu0
      %v1512 = vadd.f32 0.0, %v1511
      %v1513 = vpop.f32.mrb[0].mxu0
      %v1514 = vpop.f32.mrb[0].mxu0
      %v1515 = vadd.f32 0.0, %v1514
      %v1516 = vpop.f32.mrb[0].mxu0
      %1517 = vmatprep.mubr.bf16.mxu0 0
      %1518 = vmatmul.mubr.bf16.gmra.mrb[0].mxu0 %v1370
      %v1519 = vpop.f32.mrb[0].mxu0
      %v1520 = vadd.f32 0.0, %v1519
      %v1521 = vpop.f32.mrb[0].mxu0
      %v1522 = vpop.f32.mrb[0].mxu0
      %v1523 = vadd.f32 0.0, %v1522
      %v1524 = vpop.f32.mrb[0].mxu0
      %1525 = vmatprep.mubr.bf16.mxu0 0
      %1526 = vmatmul.mubr.bf16.gmra.mrb[0].mxu0 %v1371
      %v1527 = vpop.f32.mrb[0].mxu0
      %v1528 = vadd.f32 0.0, %v1527
      %v1529 = vpop.f32.mrb[0].mxu0
      %v1530 = vpop.f32.mrb[0].mxu0
      %v1531 = vadd.f32 0.0, %v1530
      %v1532 = vpop.f32.mrb[0].mxu0
      %1533 = vdwg.mxu0
      %v1550 = vunpack.c.l.b16 %v1348
      %v1551 = vunpack.c.l.b16 %v1349
      %v1552 = vunpack.c.l.b16 %v1350
      %v1553 = vunpack.c.l.b16 %v1351
      %v1554 = vunpack.c.l.b16 %v1352
      %v1555 = vunpack.c.l.b16 %v1353
      %v1556 = vunpack.c.l.b16 %v1354
      %v1557 = vunpack.c.l.b16 %v1355
      %v1558 = vunpack.c.l.b16 %v1356
      %v1559 = vunpack.c.l.b16 %v1357
      %v1560 = vunpack.c.l.b16 %v1358
      %v1561 = vunpack.c.l.b16 %v1359
      %v1562 = vunpack.c.l.b16 %v1360
      %v1563 = vunpack.c.l.b16 %v1361
      %v1564 = vunpack.c.l.b16 %v1362
      %v1565 = vunpack.c.l.b16 %v1363
      %v1566 = vpack.c.b16 %v1551, %v1550
      %v1567 = vpack.c.b16 %v1553, %v1552
      %v1568 = vpack.c.b16 %v1555, %v1554
      %v1569 = vpack.c.b16 %v1557, %v1556
      %v1570 = vpack.c.b16 %v1559, %v1558
      %v1571 = vpack.c.b16 %v1561, %v1560
      %v1572 = vpack.c.b16 %v1563, %v1562
      %v1573 = vpack.c.b16 %v1565, %v1564
      %1582 = vmatprep.subr.bf16.mxu0 0
      %1583 = vmatpush1.bf16.msra.mxu0 %v1566
      %1584 = vmatprep.subr.bf16.mxu0 0
      %1585 = vmatpush1.bf16.msra.mxu0 %v1567
      %1586 = vmatprep.subr.bf16.mxu0 0
      %1587 = vmatpush1.bf16.msra.mxu0 %v1568
      %1588 = vmatprep.subr.bf16.mxu0 0
      %1589 = vmatpush1.bf16.msra.mxu0 %v1569
      %1590 = vmatprep.subr.bf16.mxu0 0
      %1591 = vmatpush1.bf16.msra.mxu0 %v1570
      %1592 = vmatprep.subr.bf16.mxu0 0
      %1593 = vmatpush1.bf16.msra.mxu0 %v1571
      %1594 = vmatprep.subr.bf16.mxu0 0
      %1595 = vmatpush1.bf16.msra.mxu0 %v1572
      %1596 = vmatprep.subr.bf16.mxu0 0
      %1597 = vmatpush1.bf16.msra.mxu0 %v1573
      %1598 = vmatprep.subr.bf16.mxu0 0
      %1599 = vmatpush1.bf16.msra.mxu0 0
      %1600 = vmatprep.subr.bf16.mxu0 0
      %1601 = vmatpush1.bf16.msra.mxu0 0
      %1602 = vmatprep.subr.bf16.mxu0 0
      %1603 = vmatpush1.bf16.msra.mxu0 0
      %1604 = vmatprep.subr.bf16.mxu0 0
      %1605 = vmatpush1.bf16.msra.mxu0 0
      %1606 = vmatprep.subr.bf16.mxu0 0
      %1607 = vmatpush1.bf16.msra.mxu0 0
      %1608 = vmatprep.subr.bf16.mxu0 0
      %1609 = vmatpush1.bf16.msra.mxu0 0
      %1610 = vmatprep.subr.bf16.mxu0 0
      %1611 = vmatpush1.bf16.msra.mxu0 0
      %1612 = vmatprep.subr.bf16.mxu0 0
      %1613 = vmatpush1.bf16.msra.mxu0 0
      %1614 = vmatprep.mubr.bf16.mxu0 0
      %1615 = vmatmul.mubr.bf16.gmra.mrb[0].mxu0 %v1340
      %v1616 = vpop.f32.mrb[0].mxu0
      %v1617 = vadd.f32 %v1472, %v1616
      %v1618 = vpop.f32.mrb[0].mxu0
      %v1619 = vpop.f32.mrb[0].mxu0
      %v1620 = vadd.f32 %v1475, %v1619
      %v1621 = vpop.f32.mrb[0].mxu0
      %1622 = vmatprep.mubr.bf16.mxu0 0
      %1623 = vmatmul.mubr.bf16.gmra.mrb[0].mxu0 %v1341
      %v1624 = vpop.f32.mrb[0].mxu0
      %v1625 = vadd.f32 %v1480, %v1624
      %v1626 = vpop.f32.mrb[0].mxu0
      %v1627 = vpop.f32.mrb[0].mxu0
      %v1628 = vadd.f32 %v1483, %v1627
      %v1629 = vpop.f32.mrb[0].mxu0
      %1630 = vmatprep.mubr.bf16.mxu0 0
      %1631 = vmatmul.mubr.bf16.gmra.mrb[0].mxu0 %v1342
      %v1632 = vpop.f32.mrb[0].mxu0
      %v1633 = vadd.f32 %v1488, %v1632
      %v1634 = vpop.f32.mrb[0].mxu0
      %v1635 = vpop.f32.mrb[0].mxu0
      %v1636 = vadd.f32 %v1491, %v1635
      %v1637 = vpop.f32.mrb[0].mxu0
      %1638 = vmatprep.mubr.bf16.mxu0 0
      %1639 = vmatmul.mubr.bf16.gmra.mrb[0].mxu0 %v1343
      %v1640 = vpop.f32.mrb[0].mxu0
      %v1641 = vadd.f32 %v1496, %v1640
      %v1642 = vpop.f32.mrb[0].mxu0
      %v1643 = vpop.f32.mrb[0].mxu0
      %v1644 = vadd.f32 %v1499, %v1643
      %v1645 = vpop.f32.mrb[0].mxu0
      %1646 = vmatprep.mubr.bf16.mxu0 0
      %1647 = vmatmul.mubr.bf16.gmra.mrb[0].mxu0 %v1344
      %v1648 = vpop.f32.mrb[0].mxu0
      %v1649 = vadd.f32 %v1504, %v1648
      %v1650 = vpop.f32.mrb[0].mxu0
      %v1651 = vpop.f32.mrb[0].mxu0
      %v1652 = vadd.f32 %v1507, %v1651
      %v1653 = vpop.f32.mrb[0].mxu0
      %1654 = vmatprep.mubr.bf16.mxu0 0
      %1655 = vmatmul.mubr.bf16.gmra.mrb[0].mxu0 %v1345
      %v1656 = vpop.f32.mrb[0].mxu0
      %v1657 = vadd.f32 %v1512, %v1656
      %v1658 = vpop.f32.mrb[0].mxu0
      %v1659 = vpop.f32.mrb[0].mxu0
      %v1660 = vadd.f32 %v1515, %v1659
      %v1661 = vpop.f32.mrb[0].mxu0
      %1662 = vmatprep.mubr.bf16.mxu0 0
      %1663 = vmatmul.mubr.bf16.gmra.mrb[0].mxu0 %v1346
      %v1664 = vpop.f32.mrb[0].mxu0
      %v1665 = vadd.f32 %v1520, %v1664
      %v1666 = vpop.f32.mrb[0].mxu0
      %v1667 = vpop.f32.mrb[0].mxu0
      %v1668 = vadd.f32 %v1523, %v1667
      %v1669 = vpop.f32.mrb[0].mxu0
      %1670 = vmatprep.mubr.bf16.mxu0 0
      %1671 = vmatmul.mubr.bf16.gmra.mrb[0].mxu0 %v1347
      %v1672 = vpop.f32.mrb[0].mxu0
      %v1673 = vadd.f32 %v1528, %v1672
      %v1674 = vpop.f32.mrb[0].mxu0
      %v1675 = vpop.f32.mrb[0].mxu0
      %v1676 = vadd.f32 %v1531, %v1675
      %v1677 = vpop.f32.mrb[0].mxu0
      %1678 = vdwg.mxu0
      %v1679 = vpack.c.bf16 %v1325, %v1324
      %v1680 = vpack.c.bf16 %v1327, %v1326
      %v1681 = vpack.c.bf16 %v1329, %v1328
      %v1682 = vpack.c.bf16 %v1331, %v1330
      %v1683 = vpack.c.bf16 %v1333, %v1332
      %v1684 = vpack.c.bf16 %v1335, %v1334
      %v1685 = vpack.c.bf16 %v1337, %v1336
      %v1686 = vpack.c.bf16 %v1339, %v1338
      %s1687 = scalar_lea.vmem %s3, 128
      %v1688 = vld [vmem:[%s1687] sm:$0xf]
      %v1689 = vld [vmem:[%s1687 + $0x4] sm:$0xf]
      %v1690 = vld [vmem:[%s1687 + $0x8] sm:$0xf]
      %v1691 = vld [vmem:[%s1687 + $0xc] sm:$0xf]
      %v1692 = vld [vmem:[%s1687 + $0x10] sm:$0xf]
      %v1693 = vld [vmem:[%s1687 + $0x14] sm:$0xf]
      %v1694 = vld [vmem:[%s1687 + $0x18] sm:$0xf]
      %v1695 = vld [vmem:[%s1687 + $0x1c] sm:$0xf]
      %v1696 = vld [vmem:[%s1687 + $0x20] sm:$0xf]
      %v1697 = vld [vmem:[%s1687 + $0x24] sm:$0xf]
      %v1698 = vld [vmem:[%s1687 + $0x28] sm:$0xf]
      %v1699 = vld [vmem:[%s1687 + $0x2c] sm:$0xf]
      %v1700 = vld [vmem:[%s1687 + $0x30] sm:$0xf]
      %v1701 = vld [vmem:[%s1687 + $0x34] sm:$0xf]
      %v1702 = vld [vmem:[%s1687 + $0x38] sm:$0xf]
      %v1703 = vld [vmem:[%s1687 + $0x3c] sm:$0xf]
      %v1720 = vunpack.c.l.b16 %v1688
      %v1721 = vunpack.c.l.b16 %v1689
      %v1722 = vunpack.c.l.b16 %v1690
      %v1723 = vunpack.c.l.b16 %v1691
      %v1724 = vunpack.c.l.b16 %v1692
      %v1725 = vunpack.c.l.b16 %v1693
      %v1726 = vunpack.c.l.b16 %v1694
      %v1727 = vunpack.c.l.b16 %v1695
      %v1728 = vunpack.c.l.b16 %v1696
      %v1729 = vunpack.c.l.b16 %v1697
      %v1730 = vunpack.c.l.b16 %v1698
      %v1731 = vunpack.c.l.b16 %v1699
      %v1732 = vunpack.c.l.b16 %v1700
      %v1733 = vunpack.c.l.b16 %v1701
      %v1734 = vunpack.c.l.b16 %v1702
      %v1735 = vunpack.c.l.b16 %v1703
      %v1736 = vpack.c.b16 %v1721, %v1720
      %v1737 = vpack.c.b16 %v1723, %v1722
      %v1738 = vpack.c.b16 %v1725, %v1724
      %v1739 = vpack.c.b16 %v1727, %v1726
      %v1740 = vpack.c.b16 %v1729, %v1728
      %v1741 = vpack.c.b16 %v1731, %v1730
      %v1742 = vpack.c.b16 %v1733, %v1732
      %v1743 = vpack.c.b16 %v1735, %v1734
      %1752 = vmatprep.subr.bf16.mxu0 0
      %1753 = vmatpush1.bf16.msra.mxu0 %v1736
      %1754 = vmatprep.subr.bf16.mxu0 0
      %1755 = vmatpush1.bf16.msra.mxu0 %v1737
      %1756 = vmatprep.subr.bf16.mxu0 0
      %1757 = vmatpush1.bf16.msra.mxu0 %v1738
      %1758 = vmatprep.subr.bf16.mxu0 0
      %1759 = vmatpush1.bf16.msra.mxu0 %v1739
      %1760 = vmatprep.subr.bf16.mxu0 0
      %1761 = vmatpush1.bf16.msra.mxu0 %v1740
      %1762 = vmatprep.subr.bf16.mxu0 0
      %1763 = vmatpush1.bf16.msra.mxu0 %v1741
      %1764 = vmatprep.subr.bf16.mxu0 0
      %1765 = vmatpush1.bf16.msra.mxu0 %v1742
      %1766 = vmatprep.subr.bf16.mxu0 0
      %1767 = vmatpush1.bf16.msra.mxu0 %v1743
      %1768 = vmatprep.subr.bf16.mxu0 0
      %1769 = vmatpush1.bf16.msra.mxu0 0
      %1770 = vmatprep.subr.bf16.mxu0 0
      %1771 = vmatpush1.bf16.msra.mxu0 0
      %1772 = vmatprep.subr.bf16.mxu0 0
      %1773 = vmatpush1.bf16.msra.mxu0 0
      %1774 = vmatprep.subr.bf16.mxu0 0
      %1775 = vmatpush1.bf16.msra.mxu0 0
      %1776 = vmatprep.subr.bf16.mxu0 0
      %1777 = vmatpush1.bf16.msra.mxu0 0
      %1778 = vmatprep.subr.bf16.mxu0 0
      %1779 = vmatpush1.bf16.msra.mxu0 0
      %1780 = vmatprep.subr.bf16.mxu0 0
      %1781 = vmatpush1.bf16.msra.mxu0 0
      %1782 = vmatprep.subr.bf16.mxu0 0
      %1783 = vmatpush1.bf16.msra.mxu0 0
      %1784 = vmatprep.mubr.bf16.mxu0 0
      %1785 = vmatmul.mubr.bf16.gmra.mrb[0].mxu0 %v1679
      %v1786 = vpop.f32.mrb[0].mxu0
      %v1787 = vadd.f32 0.0, %v1786
      %v1788 = vpop.f32.mrb[0].mxu0
      %v1789 = vpop.f32.mrb[0].mxu0
      %v1790 = vadd.f32 0.0, %v1789
      %v1791 = vpop.f32.mrb[0].mxu0
      %1792 = vmatprep.mubr.bf16.mxu0 0
      %1793 = vmatmul.mubr.bf16.gmra.mrb[0].mxu0 %v1680
      %v1794 = vpop.f32.mrb[0].mxu0
      %v1795 = vadd.f32 0.0, %v1794
      %v1796 = vpop.f32.mrb[0].mxu0
      %v1797 = vpop.f32.mrb[0].mxu0
      %v1798 = vadd.f32 0.0, %v1797
      %v1799 = vpop.f32.mrb[0].mxu0
      %1800 = vmatprep.mubr.bf16.mxu0 0
      %1801 = vmatmul.mubr.bf16.gmra.mrb[0].mxu0 %v1681
      %v1802 = vpop.f32.mrb[0].mxu0
      %v1803 = vadd.f32 0.0, %v1802
      %v1804 = vpop.f32.mrb[0].mxu0
      %v1805 = vpop.f32.mrb[0].mxu0
      %v1806 = vadd.f32 0.0, %v1805
      %v1807 = vpop.f32.mrb[0].mxu0
      %1808 = vmatprep.mubr.bf16.mxu0 0
      %1809 = vmatmul.mubr.bf16.gmra.mrb[0].mxu0 %v1682
      %v1810 = vpop.f32.mrb[0].mxu0
      %v1811 = vadd.f32 0.0, %v1810
      %v1812 = vpop.f32.mrb[0].mxu0
      %v1813 = vpop.f32.mrb[0].mxu0
      %v1814 = vadd.f32 0.0, %v1813
      %v1815 = vpop.f32.mrb[0].mxu0
      %1816 = vmatprep.mubr.bf16.mxu0 0
      %1817 = vmatmul.mubr.bf16.gmra.mrb[0].mxu0 %v1683
      %v1818 = vpop.f32.mrb[0].mxu0
      %v1819 = vadd.f32 0.0, %v1818
      %v1820 = vpop.f32.mrb[0].mxu0
      %v1821 = vpop.f32.mrb[0].mxu0
      %v1822 = vadd.f32 0.0, %v1821
      %v1823 = vpop.f32.mrb[0].mxu0
      %1824 = vmatprep.mubr.bf16.mxu0 0
      %1825 = vmatmul.mubr.bf16.gmra.mrb[0].mxu0 %v1684
      %v1826 = vpop.f32.mrb[0].mxu0
      %v1827 = vadd.f32 0.0, %v1826
      %v1828 = vpop.f32.mrb[0].mxu0
      %v1829 = vpop.f32.mrb[0].mxu0
      %v1830 = vadd.f32 0.0, %v1829
      %v1831 = vpop.f32.mrb[0].mxu0
      %1832 = vmatprep.mubr.bf16.mxu0 0
      %1833 = vmatmul.mubr.bf16.gmra.mrb[0].mxu0 %v1685
      %v1834 = vpop.f32.mrb[0].mxu0
      %v1835 = vadd.f32 0.0, %v1834
      %v1836 = vpop.f32.mrb[0].mxu0
      %v1837 = vpop.f32.mrb[0].mxu0
      %v1838 = vadd.f32 0.0, %v1837
      %v1839 = vpop.f32.mrb[0].mxu0
      %1840 = vmatprep.mubr.bf16.mxu0 0
      %1841 = vmatmul.mubr.bf16.gmra.mrb[0].mxu0 %v1686
      %v1842 = vpop.f32.mrb[0].mxu0
      %v1843 = vadd.f32 0.0, %v1842
      %v1844 = vpop.f32.mrb[0].mxu0
      %v1845 = vpop.f32.mrb[0].mxu0
      %v1846 = vadd.f32 0.0, %v1845
      %v1847 = vpop.f32.mrb[0].mxu0
      %1848 = vdwg.mxu0
      %v1849 = vadd.f32 %v1617, %v1787
      %v1850 = vadd.f32 %v1620, %v1790
      %v1851 = vadd.f32 %v1625, %v1795
      %v1852 = vadd.f32 %v1628, %v1798
      %v1853 = vadd.f32 %v1633, %v1803
      %v1854 = vadd.f32 %v1636, %v1806
      %v1855 = vadd.f32 %v1641, %v1811
      %v1856 = vadd.f32 %v1644, %v1814
      %v1857 = vadd.f32 %v1649, %v1819
      %v1858 = vadd.f32 %v1652, %v1822
      %v1859 = vadd.f32 %v1657, %v1827
      %v1860 = vadd.f32 %v1660, %v1830
      %v1861 = vadd.f32 %v1665, %v1835
      %v1862 = vadd.f32 %v1668, %v1838
      %v1863 = vadd.f32 %v1673, %v1843
      %v1864 = vadd.f32 %v1676, %v1846
      %v1865 = vld [vmem:[%s4] sm:$0x1]
      %v1867 = vlaneseq
      %v1868 = vshrl.u32 %v1867, 7
      %v1869 = vsub.s32 0, %v1868
      %v1870 = vrot.slane %v1865, %v1869
      %v1872 = vadd.f32 %v1849, %v1870
      %v1873 = vadd.f32 %v1850, %v1870
      %v1874 = vadd.f32 %v1851, %v1870
      %v1875 = vadd.f32 %v1852, %v1870
      %v1876 = vadd.f32 %v1853, %v1870
      %v1877 = vadd.f32 %v1854, %v1870
      %v1878 = vadd.f32 %v1855, %v1870
      %v1879 = vadd.f32 %v1856, %v1870
      %v1880 = vadd.f32 %v1857, %v1870
      %v1881 = vadd.f32 %v1858, %v1870
      %v1882 = vadd.f32 %v1859, %v1870
      %v1883 = vadd.f32 %v1860, %v1870
      %v1884 = vadd.f32 %v1861, %v1870
      %v1885 = vadd.f32 %v1862, %v1870
      %v1886 = vadd.f32 %v1863, %v1870
      %v1887 = vadd.f32 %v1864, %v1870
      %v1888 = vadd.f32 %v1872, %v470
      %v1889 = vadd.f32 %v1873, %v471
      %v1890 = vadd.f32 %v1874, %v472
      %v1891 = vadd.f32 %v1875, %v473
      %v1892 = vadd.f32 %v1876, %v474
      %v1893 = vadd.f32 %v1877, %v475
      %v1894 = vadd.f32 %v1878, %v476
      %v1895 = vadd.f32 %v1879, %v477
      %v1896 = vadd.f32 %v1880, %v478
      %v1897 = vadd.f32 %v1881, %v479
      %v1898 = vadd.f32 %v1882, %v480
      %v1899 = vadd.f32 %v1883, %v481
      %v1900 = vadd.f32 %v1884, %v482
      %v1901 = vadd.f32 %v1885, %v483
      %v1902 = vadd.f32 %v1886, %v484
      %v1903 = vadd.f32 %v1887, %v485
      %vm1904 = vcmp.gt.f32.partialorder %v1888, 0.0
      %vm1905 = vcmp.gt.f32.partialorder %v1889, 0.0
      %vm1906 = vcmp.gt.f32.partialorder %v1890, 0.0
      %vm1907 = vcmp.gt.f32.partialorder %v1891, 0.0
      %vm1908 = vcmp.gt.f32.partialorder %v1892, 0.0
      %vm1909 = vcmp.gt.f32.partialorder %v1893, 0.0
      %vm1910 = vcmp.gt.f32.partialorder %v1894, 0.0
      %vm1911 = vcmp.gt.f32.partialorder %v1895, 0.0
      %vm1912 = vcmp.gt.f32.partialorder %v1896, 0.0
      %vm1913 = vcmp.gt.f32.partialorder %v1897, 0.0
      %vm1914 = vcmp.gt.f32.partialorder %v1898, 0.0
      %vm1915 = vcmp.gt.f32.partialorder %v1899, 0.0
      %vm1916 = vcmp.gt.f32.partialorder %v1900, 0.0
      %vm1917 = vcmp.gt.f32.partialorder %v1901, 0.0
      %vm1918 = vcmp.gt.f32.partialorder %v1902, 0.0
      %vm1919 = vcmp.gt.f32.partialorder %v1903, 0.0
      %v1920 = vmul.f32 %v1888, 0.01
      %v1921 = vmul.f32 %v1889, 0.01
      %v1922 = vmul.f32 %v1890, 0.01
      %v1923 = vmul.f32 %v1891, 0.01
      %v1924 = vmul.f32 %v1892, 0.01
      %v1925 = vmul.f32 %v1893, 0.01
      %v1926 = vmul.f32 %v1894, 0.01
      %v1927 = vmul.f32 %v1895, 0.01
      %v1928 = vmul.f32 %v1896, 0.01
      %v1929 = vmul.f32 %v1897, 0.01
      %v1930 = vmul.f32 %v1898, 0.01
      %v1931 = vmul.f32 %v1899, 0.01
      %v1932 = vmul.f32 %v1900, 0.01
      %v1933 = vmul.f32 %v1901, 0.01
      %v1934 = vmul.f32 %v1902, 0.01
      %v1935 = vmul.f32 %v1903, 0.01
      %v1936 = vsel %vm1904, %v1888, %v1920
      %v1937 = vsel %vm1905, %v1889, %v1921
      %v1938 = vsel %vm1906, %v1890, %v1922
      %v1939 = vsel %vm1907, %v1891, %v1923
      %v1940 = vsel %vm1908, %v1892, %v1924
      %v1941 = vsel %vm1909, %v1893, %v1925
      %v1942 = vsel %vm1910, %v1894, %v1926
      %v1943 = vsel %vm1911, %v1895, %v1927
      %v1944 = vsel %vm1912, %v1896, %v1928
      %v1945 = vsel %vm1913, %v1897, %v1929
      %v1946 = vsel %vm1914, %v1898, %v1930
      %v1947 = vsel %vm1915, %v1899, %v1931
      %v1948 = vsel %vm1916, %v1900, %v1932
      %v1949 = vsel %vm1917, %v1901, %v1933
      %v1950 = vsel %vm1918, %v1902, %v1934
      %v1951 = vsel %vm1919, %v1903, %v1935
      %1952 = vst [vmem:[%s226] sm:$0xff] %v1936
      %1953 = vst [vmem:[%s226 + $0x8] sm:$0xff] %v1937
      %1954 = vst [vmem:[%s226 + $0x10] sm:$0xff] %v1938
      %1955 = vst [vmem:[%s226 + $0x18] sm:$0xff] %v1939
      %1956 = vst [vmem:[%s226 + $0x20] sm:$0xff] %v1940
      %1957 = vst [vmem:[%s226 + $0x28] sm:$0xff] %v1941
      %1958 = vst [vmem:[%s226 + $0x30] sm:$0xff] %v1942
      %1959 = vst [vmem:[%s226 + $0x38] sm:$0xff] %v1943
      %1960 = vst [vmem:[%s226 + $0x40] sm:$0xff] %v1944
      %1961 = vst [vmem:[%s226 + $0x48] sm:$0xff] %v1945
      %1962 = vst [vmem:[%s226 + $0x50] sm:$0xff] %v1946
      %1963 = vst [vmem:[%s226 + $0x58] sm:$0xff] %v1947
      %1964 = vst [vmem:[%s226 + $0x60] sm:$0xff] %v1948
      %1965 = vst [vmem:[%s226 + $0x68] sm:$0xff] %v1949
      %1966 = vst [vmem:[%s226 + $0x70] sm:$0xff] %v1950
      %1967 = vst [vmem:[%s226 + $0x78] sm:$0xff] %v1951
      %s1968 = smul.u32 16, %s16
      %p1969 = scmp.lt.s32.totalorder %s1968, 31
      %s1970 = scalar_select %p1969, %s1968, 31
      %s1971 = smul.addr %s1970, 8
      %s1972 = scalar_lea.vmem %s5, %s1971
      // Predicated region
      $region41: #{basic_block_pallas.1} parent=39 // pred_check
        %p1973 = pneg %p144
      $region42: #{basic_block_pallas.1} parent=39 // pred_check_branch
        %1975 = sbr.rel (%p1973) target = $region44
      $region43: #{basic_block_pallas.1} parent=39 // pred_region
        %s1976 = smul.u32 16, %s16
      $region44: #{basic_block_pallas.1} parent=39 // pred_fallthru
        _
    $region40: #{basic_block_pallas.1} parent=5 // pred_fallthru
      _
    %p1977 = scmp.le.s32.totalorder 2, %s11
    // Predicated region
    $region45: #{basic_block_pallas.1} parent=5 // pred_check
      %p1978 = pneg %p1977
    $region46: #{basic_block_pallas.1} parent=5 // pred_check_branch
      %1980 = sbr.rel (%p1978) target = $region48
    $region47: #{basic_block_pallas.1} parent=5 // pred_region
      %s1981 = ssub.s32 %s11, 2
      // Predicated region
      $region49: #{basic_block_pallas.1} parent=47 // pred_check
        %p1982 = pneg %p150
      $region50: #{basic_block_pallas.1} parent=47 // pred_check_branch
        %1984 = sbr.rel (%p1982) target = $region52
      $region51: #{basic_block_pallas.1} parent=47 // pred_region
        %s1985 = smul.u32 16, %s17
        %p1986 = scmp.lt.s32.totalorder %s1985, 31
        %s1987 = scalar_select %p1986, %s1985, 31
        %s1988 = smul.addr %s1987, 8
        %s1989 = scalar_lea.vmem %s5, %s1988
      $region52: #{basic_block_pallas.1} parent=47 // pred_fallthru
        _
    $region48: #{basic_block_pallas.1} parent=5 // pred_fallthru
      _
  $region6: #{basic_block_pallas.1} parent=0 // loop_footer
    %s15 = sadd.s32 1, %s11
  $region7: #{basic_block_pallas.1} parent=0 // loop_footer_branch
    %10 = sbr.rel target = $region3
  $region8: #{basic_block_pallas.1} parent=0 // loop_exit
    _

</llo_original>
